<compile_context>
chip_gen: v7x
topology: tpu7x:2x2x1
jax: 0.10.0
libtpu: 0.0.40
codegen_flags: <defaults>
</compile_context>

<pallas_src>
import functools

import jax
import jax.numpy as jnp
from jax.experimental import pallas as pl
from jax.experimental.pallas import tpu as pltpu


# ----------------------------- in-kernel loss math ---------------------------


def _pair_losses(a, b, inv_tau):
    """Per-row semi_loss(a, b) + semi_loss(b, a), shape (N, 1).

    Rows are L2-normalized here (shared between the two directions).
    """
    eps = 1e-12                                              # F.normalize default
    a_n = a / jnp.maximum(jnp.sqrt(jnp.sum(a * a, axis=-1, keepdims=True)), eps)
    b_n = b / jnp.maximum(jnp.sqrt(jnp.sum(b * b, axis=-1, keepdims=True)), eps)

    # N x N cosine similarities on the MXU (f32 accumulation).
    sim_aa = jnp.dot(a_n, a_n.T, preferred_element_type=jnp.float32)
    sim_bb = jnp.dot(b_n, b_n.T, preferred_element_type=jnp.float32)
    sim_ab = jnp.dot(a_n, b_n.T, preferred_element_type=jnp.float32)
    sim_ba = jnp.dot(b_n, a_n.T, preferred_element_type=jnp.float32)  # == sim_ab.T

    # Shift by the per-row max (self-similarity == 1 exactly for unit rows)
    # before exp: safe for any tau, and the shift cancels in the ratio.
    refl_a = jnp.exp((sim_aa - 1.0) * inv_tau)
    refl_b = jnp.exp((sim_bb - 1.0) * inv_tau)
    btw_ab = jnp.exp((sim_ab - 1.0) * inv_tau)
    btw_ba = jnp.exp((sim_ba - 1.0) * inv_tau)

    # diag(refl) == exp(0) == 1 after the shift; log(diag(between)) comes
    # directly from the row-wise dot -> no eye mask, no masked reductions.
    log_bdiag = (jnp.sum(a_n * b_n, axis=-1, keepdims=True) - 1.0) * inv_tau  # (N,1)

    denom_a = (jnp.sum(refl_a, axis=1, keepdims=True)
               + jnp.sum(btw_ab, axis=1, keepdims=True) - 1.0)
    denom_b = (jnp.sum(refl_b, axis=1, keepdims=True)
               + jnp.sum(btw_ba, axis=1, keepdims=True) - 1.0)

    # -log(diag / denom) == log(denom) - log(diag); no division needed.
    return jnp.log(denom_a) + jnp.log(denom_b) - 2.0 * log_bdiag


# ----------------------------- fused kernel ----------------------------------


def _cld_kernel(x1_ref, x2_ref, w_ref, b_ref,              # inputs
                out_ref,                                    # output
                z1c_ref, z2c_ref, z1hw_ref, z2hw_ref,       # VMEM scratch
                *, inv_hw, inv_tau, hw_tile):
    """Per HW-tile: accumulate channel means + write 1x1-conv tile into VMEM
    scratch; on the last tile compute all four semi_loss terms."""
    k = pl.program_id(0)

    x1 = x1_ref[...].astype(jnp.float32)          # (B, C, Thw)
    x2 = x2_ref[...].astype(jnp.float32)          # (B, C, Thw)
    w = w_ref[...].astype(jnp.float32)            # (1, C)
    bias = b_ref[0]                               # scalar, read from SMEM

    # --- prep: channel means (accumulated) + 1x1 conv (tile write) -----------
    @pl.when(k == 0)
    def _init():
        z1c_ref[...] = jnp.zeros_like(z1c_ref)
        z2c_ref[...] = jnp.zeros_like(z2c_ref)

    z1c_ref[...] += jnp.sum(x1, axis=-1) * inv_hw          # (B, C)
    z2c_ref[...] += jnp.sum(x2, axis=-1) * inv_hw

    # 1x1 conv, single output channel == weighted sum over C + bias.
    wb = w[:, :, None]                                      # (1, C, 1)
    off = pl.multiple_of(k * hw_tile, hw_tile)
    z1hw_ref[:, pl.ds(off, hw_tile)] = jnp.sum(x1 * wb, axis=1) + bias  # (B, Thw)
    z2hw_ref[:, pl.ds(off, hw_tile)] = jnp.sum(x2 * wb, axis=1) + bias

    # --- finalize: contrastive losses on the last HW tile ---------------------
    @pl.when(k == pl.num_programs(0) - 1)
    def _finalize():
        loss_c = _pair_losses(z1c_ref[...], z2c_ref[...], inv_tau)    # l1 + l2
        loss_hw = _pair_losses(z1hw_ref[...], z2hw_ref[...], inv_tau)  # l3 + l4
        # (N, 1) output; at larger N a lane-dense (1, N) layout would avoid
        # masked partial stores, but it is irrelevant at N == batch size here.
        out_ref[...] = (loss_c + loss_hw) * 0.5


def _pick_hw_tile(hw):
    # Biggest lane-dense tile that divides HW (double-buffered by the Pallas
    # pipeline; sized well inside the 32 MiB scoped-VMEM default).
    for t in (2048, 1024, 512, 256, 128):
        if hw % t == 0:
            return t
    return hw  # full extent (exempt from the 128-lane divisibility rule)


# ----------------------------- forward ---------------------------------------


def cld_forward(z1, z2, w, b, tau=0.5, mean=True):
    """Matches CLD.forward with batch_size=0 (unbatched semi_loss path)."""
    B, C, H, W = z1.shape
    HW = H * W
    # Free reshapes only; native dtype is DMA'd, the kernel casts after load.
    z1f = z1.reshape(B, C, HW)
    z2f = z2.reshape(B, C, HW)
    t = _pick_hw_tile(HW)
    grid = (HW // t,)

    # NOTE: the PyTorch forward uses conv_z1 for BOTH z1 and z2 (conv_z2 is
    # unused); reproduced exactly.
    ret = pl.pallas_call(
        functools.partial(_cld_kernel, inv_hw=1.0 / HW, inv_tau=1.0 / tau,
                          hw_tile=t),
        grid=grid,
        in_specs=[
            pl.BlockSpec((B, C, t), lambda k: (0, 0, k)),
            pl.BlockSpec((B, C, t), lambda k: (0, 0, k)),
            pl.BlockSpec((1, C), lambda k: (0, 0)),                    # resident
            pl.BlockSpec(memory_space=pltpu.MemorySpace.SMEM),         # bias scalar
        ],
        out_specs=pl.BlockSpec((B, 1), lambda k: (0, 0)),              # resident
        out_shape=jax.ShapeDtypeStruct((B, 1), jnp.float32),
        scratch_shapes=[
            pltpu.VMEM((B, C), jnp.float32),     # z1 channel means (accumulator)
            pltpu.VMEM((B, C), jnp.float32),     # z2 channel means (accumulator)
            pltpu.VMEM((B, HW), jnp.float32),    # conv(z1) features, full HW
            pltpu.VMEM((B, HW), jnp.float32),    # conv(z2) features, full HW
        ],
        compiler_params=pltpu.CompilerParams(
            dimension_semantics=("arbitrary",),   # accumulates over HW tiles
            vmem_limit_bytes=32 * 1024 * 1024,    # safe on v5e/v6e/v7x
        ),
    )(z1f, z2f, w, b)

    ret = ret[:, 0]                               # (B,) = 0.5*(l1+l2+l3+l4)
    return jnp.mean(ret) if mean else jnp.sum(ret)
    # TODO(synk): batched_semi_loss (batch_size > 0) chunked path not needed —
    # it produces the same values as the unbatched path implemented here.


# ----------------------------- pure-JAX reference ----------------------------


def _ref_semi_loss(a, b, tau):
    def nrm(v):
        return v / jnp.maximum(jnp.linalg.norm(v, axis=1, keepdims=True), 1e-12)
    a_n, b_n = nrm(a), nrm(b)
    refl = jnp.exp(a_n @ a_n.T / tau)
    between = jnp.exp(a_n @ b_n.T / tau)
    return -jnp.log(jnp.diag(between) /
                    (refl.sum(1) + between.sum(1) - jnp.diag(refl)))


def _ref_forward(z1, z2, w, b, tau=0.5):
    B, C, H, W = z1.shape
    z1_c = z1.reshape(B, C, -1).mean(-1)
    z2_c = z2.reshape(B, C, -1).mean(-1)
    z1_hw = (jnp.einsum('oc,bchw->bohw', w, z1) + b[0]).reshape(B, -1)
    z2_hw = (jnp.einsum('oc,bchw->bohw', w, z2) + b[0]).reshape(B, -1)
    l1 = _ref_semi_loss(z1_c, z2_c, tau)
    l2 = _ref_semi_loss(z2_c, z1_c, tau)
    l3 = _ref_semi_loss(z1_hw, z2_hw, tau)
    l4 = _ref_semi_loss(z2_hw, z1_hw, tau)
    return jnp.mean((l1 + l2 + l3 + l4) * 0.5)


# ----------------------------- main -------------------------------------------


if __name__ == "__main__":
    key = jax.random.PRNGKey(0)
    k1, k2, k3, k4 = jax.random.split(key, 4)

    B, C, H, W = 2, 4, 16, 16
    z1 = jax.random.normal(k1, (B, C, H, W), jnp.float32)
    z2 = jax.random.normal(k2, (B, C, H, W), jnp.float32)

    # conv_z1 parameters: weight (out=1, in=C, 1, 1) stored as (1, C); bias (1,)
    w = jax.random.normal(k3, (1, C), jnp.float32) * 0.1
    b = jax.random.normal(k4, (1,), jnp.float32) * 0.1

    out = cld_forward(z1, z2, w, b, tau=0.5, mean=True)
    out = jax.block_until_ready(out)

    ref = _ref_forward(z1, z2, w, b, tau=0.5)
    assert jnp.allclose(out, ref, rtol=1e-3, atol=1e-3), (out, ref)

    print("KERNEL_OK")
</pallas_src>

<mosaic_0001>
module attributes {stable_mosaic.version = 11 : i64} {
  func.func @_cld_kernel(%arg0: i32, %arg1: memref<2x4x256xf32, #tpu.memory_space<vmem>>, %arg2: memref<2x4x256xf32, #tpu.memory_space<vmem>>, %arg3: memref<1x4xf32, #tpu.memory_space<vmem>>, %arg4: memref<1xf32, #tpu.memory_space<smem>>, %arg5: memref<2x1xf32, #tpu.memory_space<vmem>>, %arg6: memref<2x4xf32, #tpu.memory_space<vmem>>, %arg7: memref<2x4xf32, #tpu.memory_space<vmem>>, %arg8: memref<2x256xf32, #tpu.memory_space<vmem>>, %arg9: memref<2x256xf32, #tpu.memory_space<vmem>>) attributes {dimension_semantics = [#tpu.dimension_semantics<arbitrary>], iteration_bounds = array<i64: 1>, scalar_prefetch = 0 : i64, scratch_operands = 4 : i64, tpu.core_type = #tpu.core_type<tc>, window_params = [{transform_indices = @transform_0, window_bounds = array<i64: 2, 4, 256>}, {transform_indices = @transform_1, window_bounds = array<i64: 2, 4, 256>}, {pipeline_mode = #tpu.pipeline_mode<synchronous>, transform_indices = @transform_2, window_bounds = array<i64: 1, 4>}, {transform_indices = @transform_3, window_bounds = array<i64: 1>}, {pipeline_mode = #tpu.pipeline_mode<synchronous>, transform_indices = @transform_4, window_bounds = array<i64: 2, 1>}]} {
    %c0 = arith.constant 0 : index
    %c0_0 = arith.constant 0 : index
    %c0_1 = arith.constant 0 : index
    %0 = vector.load %arg1[%c0, %c0_0, %c0_1] : memref<2x4x256xf32, #tpu.memory_space<vmem>>, vector<2x4x256xf32>
    %c0_2 = arith.constant 0 : index
    %c0_3 = arith.constant 0 : index
    %c0_4 = arith.constant 0 : index
    %1 = vector.load %arg2[%c0_2, %c0_3, %c0_4] : memref<2x4x256xf32, #tpu.memory_space<vmem>>, vector<2x4x256xf32>
    %c0_5 = arith.constant 0 : index
    %c0_6 = arith.constant 0 : index
    %2 = vector.load %arg3[%c0_5, %c0_6] : memref<1x4xf32, #tpu.memory_space<vmem>>, vector<1x4xf32>
    %c0_7 = arith.constant 0 : index
    %3 = memref.load %arg4[%c0_7] : memref<1xf32, #tpu.memory_space<smem>>
    %c0_i32 = arith.constant 0 : i32
    %4 = arith.cmpi eq, %arg0, %c0_i32 : i32
    %5 = arith.extui %4 : i1 to i32
    %c0_i32_8 = arith.constant 0 : i32
    %6 = arith.cmpi ne, %5, %c0_i32_8 : i32
    scf.if %6 {
      %cst_26 = arith.constant 0.000000e+00 : f32
      %39 = vector.broadcast %cst_26 : f32 to vector<2x4xf32>
      %c0_27 = arith.constant 0 : index
      %c0_28 = arith.constant 0 : index
      %40 = vector.load %arg6[%c0_27, %c0_28] : memref<2x4xf32, #tpu.memory_space<vmem>>, vector<2x4xf32>
      tpu.vector_store %arg6[%c0_27, %c0_28], %39 {strides = array<i32>} : memref<2x4xf32, #tpu.memory_space<vmem>>, vector<2x4xf32>,
      %cst_29 = arith.constant 0.000000e+00 : f32
      %41 = vector.broadcast %cst_29 : f32 to vector<2x4xf32>
      %c0_30 = arith.constant 0 : index
      %c0_31 = arith.constant 0 : index
      %42 = vector.load %arg7[%c0_30, %c0_31] : memref<2x4xf32, #tpu.memory_space<vmem>>, vector<2x4xf32>
      tpu.vector_store %arg7[%c0_30, %c0_31], %41 {strides = array<i32>} : memref<2x4xf32, #tpu.memory_space<vmem>>, vector<2x4xf32>,
    } else {
    }
    %c0_9 = arith.constant 0 : index
    %c0_10 = arith.constant 0 : index
    %7 = vector.load %arg6[%c0_9, %c0_10] : memref<2x4xf32, #tpu.memory_space<vmem>>, vector<2x4xf32>
    %cst = arith.constant dense<0.000000e+00> : vector<2x4xf32>
    %8 = vector.multi_reduction <add>, %0, %cst [2] : vector<2x4x256xf32> to vector<2x4xf32>
    %cst_11 = arith.constant 3.906250e-03 : f32
    %9 = vector.broadcast %cst_11 : f32 to vector<2x4xf32>
    %10 = arith.mulf %8, %9 : vector<2x4xf32>
    %11 = arith.addf %7, %10 : vector<2x4xf32>
    %c0_12 = arith.constant 0 : index
    %c0_13 = arith.constant 0 : index
    %12 = vector.load %arg6[%c0_12, %c0_13] : memref<2x4xf32, #tpu.memory_space<vmem>>, vector<2x4xf32>
    tpu.vector_store %arg6[%c0_12, %c0_13], %11 {strides = array<i32>} : memref<2x4xf32, #tpu.memory_space<vmem>>, vector<2x4xf32>,
    %c0_14 = arith.constant 0 : index
    %c0_15 = arith.constant 0 : index
    %13 = vector.load %arg7[%c0_14, %c0_15] : memref<2x4xf32, #tpu.memory_space<vmem>>, vector<2x4xf32>
    %cst_16 = arith.constant dense<0.000000e+00> : vector<2x4xf32>
    %14 = vector.multi_reduction <add>, %1, %cst_16 [2] : vector<2x4x256xf32> to vector<2x4xf32>
    %cst_17 = arith.constant 3.906250e-03 : f32
    %15 = vector.broadcast %cst_17 : f32 to vector<2x4xf32>
    %16 = arith.mulf %14, %15 : vector<2x4xf32>
    %17 = arith.addf %13, %16 : vector<2x4xf32>
    %c0_18 = arith.constant 0 : index
    %c0_19 = arith.constant 0 : index
    %18 = vector.load %arg7[%c0_18, %c0_19] : memref<2x4xf32, #tpu.memory_space<vmem>>, vector<2x4xf32>
    tpu.vector_store %arg7[%c0_18, %c0_19], %17 {strides = array<i32>} : memref<2x4xf32, #tpu.memory_space<vmem>>, vector<2x4xf32>,
    %19 = vector.shape_cast %2 : vector<1x4xf32> to vector<1x4x1xf32>
    %c256_i32 = arith.constant 256 : i32
    %20 = arith.muli %arg0, %c256_i32 : i32
    %21 = tpu.assume_multiple %20, 256 : i32
    %22 = vector.broadcast %19 : vector<1x4x1xf32> to vector<2x4x256xf32>
    %23 = arith.mulf %0, %22 : vector<2x4x256xf32>
    %cst_20 = arith.constant dense<0.000000e+00> : vector<2x256xf32>
    %24 = vector.multi_reduction <add>, %23, %cst_20 [1] : vector<2x4x256xf32> to vector<2x256xf32>
    %25 = vector.broadcast %3 : f32 to vector<2x256xf32>
    %26 = arith.addf %24, %25 : vector<2x256xf32>
    %c0_21 = arith.constant 0 : index
    %27 = arith.index_cast %21 : i32 to index
    %28 = vector.load %arg8[%c0_21, %27] : memref<2x256xf32, #tpu.memory_space<vmem>>, vector<2x256xf32>
    tpu.vector_store %arg8[%c0_21, %27], %26 {strides = array<i32>} : memref<2x256xf32, #tpu.memory_space<vmem>>, vector<2x256xf32>,
    %29 = vector.broadcast %19 : vector<1x4x1xf32> to vector<2x4x256xf32>
    %30 = arith.mulf %1, %29 : vector<2x4x256xf32>
    %cst_22 = arith.constant dense<0.000000e+00> : vector<2x256xf32>
    %31 = vector.multi_reduction <add>, %30, %cst_22 [1] : vector<2x4x256xf32> to vector<2x256xf32>
    %32 = vector.broadcast %3 : f32 to vector<2x256xf32>
    %33 = arith.addf %31, %32 : vector<2x256xf32>
    %c0_23 = arith.constant 0 : index
    %34 = arith.index_cast %21 : i32 to index
    %35 = vector.load %arg9[%c0_23, %34] : memref<2x256xf32, #tpu.memory_space<vmem>>, vector<2x256xf32>
    tpu.vector_store %arg9[%c0_23, %34], %33 {strides = array<i32>} : memref<2x256xf32, #tpu.memory_space<vmem>>, vector<2x256xf32>,
    %c0_i32_24 = arith.constant 0 : i32
    %36 = arith.cmpi eq, %arg0, %c0_i32_24 : i32
    %37 = arith.extui %36 : i1 to i32
    %c0_i32_25 = arith.constant 0 : i32
    %38 = arith.cmpi ne, %37, %c0_i32_25 : i32
    scf.if %38 {
      %c0_26 = arith.constant 0 : index
      %c0_27 = arith.constant 0 : index
      %39 = vector.load %arg6[%c0_26, %c0_27] : memref<2x4xf32, #tpu.memory_space<vmem>>, vector<2x4xf32>
      %c0_28 = arith.constant 0 : index
      %c0_29 = arith.constant 0 : index
      %40 = vector.load %arg7[%c0_28, %c0_29] : memref<2x4xf32, #tpu.memory_space<vmem>>, vector<2x4xf32>
      %41 = arith.mulf %39, %39 : vector<2x4xf32>
      %cst_30 = arith.constant dense<0.000000e+00> : vector<2xf32>
      %42 = vector.multi_reduction <add>, %41, %cst_30 [1] : vector<2x4xf32> to vector<2xf32>
      %43 = vector.shape_cast %42 : vector<2xf32> to vector<2x1xf32>
      %44 = math.sqrt %43 : vector<2x1xf32>
      %cst_31 = arith.constant 9.99999996E-13 : f32
      %45 = vector.broadcast %cst_31 : f32 to vector<2x1xf32>
      %46 = arith.maximumf %44, %45 : vector<2x1xf32>
      %47 = vector.broadcast %46 : vector<2x1xf32> to vector<2x4xf32>
      %48 = arith.divf %39, %47 : vector<2x4xf32>
      %49 = arith.mulf %40, %40 : vector<2x4xf32>
      %cst_32 = arith.constant dense<0.000000e+00> : vector<2xf32>
      %50 = vector.multi_reduction <add>, %49, %cst_32 [1] : vector<2x4xf32> to vector<2xf32>
      %51 = vector.shape_cast %50 : vector<2xf32> to vector<2x1xf32>
      %52 = math.sqrt %51 : vector<2x1xf32>
      %cst_33 = arith.constant 9.99999996E-13 : f32
      %53 = vector.broadcast %cst_33 : f32 to vector<2x1xf32>
      %54 = arith.maximumf %52, %53 : vector<2x1xf32>
      %55 = vector.broadcast %54 : vector<2x1xf32> to vector<2x4xf32>
      %56 = arith.divf %40, %55 : vector<2x4xf32>
      %57 = tpu.transpose %48, [1, 0] : vector<2x4xf32> -> vector<4x2xf32>
      %cst_34 = arith.constant dense<0.000000e+00> : vector<2x2xf32>
      %58 = tpu.matmul %48, %57, %cst_34 {dimension_numbers = #tpu.dot_dimension_numbers<[1], [0], [0], [1], [0, 0, 1, 1], [], []>} : vector<2x4xf32>, vector<4x2xf32>, vector<2x2xf32> -> vector<2x2xf32>
      %59 = tpu.transpose %56, [1, 0] : vector<2x4xf32> -> vector<4x2xf32>
      %cst_35 = arith.constant dense<0.000000e+00> : vector<2x2xf32>
      %60 = tpu.matmul %56, %59, %cst_35 {dimension_numbers = #tpu.dot_dimension_numbers<[1], [0], [0], [1], [0, 0, 1, 1], [], []>} : vector<2x4xf32>, vector<4x2xf32>, vector<2x2xf32> -> vector<2x2xf32>
      %61 = tpu.transpose %56, [1, 0] : vector<2x4xf32> -> vector<4x2xf32>
      %cst_36 = arith.constant dense<0.000000e+00> : vector<2x2xf32>
      %62 = tpu.matmul %48, %61, %cst_36 {dimension_numbers = #tpu.dot_dimension_numbers<[1], [0], [0], [1], [0, 0, 1, 1], [], []>} : vector<2x4xf32>, vector<4x2xf32>, vector<2x2xf32> -> vector<2x2xf32>
      %63 = tpu.transpose %48, [1, 0] : vector<2x4xf32> -> vector<4x2xf32>
      %cst_37 = arith.constant dense<0.000000e+00> : vector<2x2xf32>
      %64 = tpu.matmul %56, %63, %cst_37 {dimension_numbers = #tpu.dot_dimension_numbers<[1], [0], [0], [1], [0, 0, 1, 1], [], []>} : vector<2x4xf32>, vector<4x2xf32>, vector<2x2xf32> -> vector<2x2xf32>
      %cst_38 = arith.constant 1.000000e+00 : f32
      %65 = vector.broadcast %cst_38 : f32 to vector<2x2xf32>
      %66 = arith.subf %58, %65 : vector<2x2xf32>
      %cst_39 = arith.constant 2.000000e+00 : f32
      %67 = vector.broadcast %cst_39 : f32 to vector<2x2xf32>
      %68 = arith.mulf %66, %67 : vector<2x2xf32>
      %69 = math.exp %68 : vector<2x2xf32>
      %cst_40 = arith.constant 1.000000e+00 : f32
      %70 = vector.broadcast %cst_40 : f32 to vector<2x2xf32>
      %71 = arith.subf %60, %70 : vector<2x2xf32>
      %cst_41 = arith.constant 2.000000e+00 : f32
      %72 = vector.broadcast %cst_41 : f32 to vector<2x2xf32>
      %73 = arith.mulf %71, %72 : vector<2x2xf32>
      %74 = math.exp %73 : vector<2x2xf32>
      %cst_42 = arith.constant 1.000000e+00 : f32
      %75 = vector.broadcast %cst_42 : f32 to vector<2x2xf32>
      %76 = arith.subf %62, %75 : vector<2x2xf32>
      %cst_43 = arith.constant 2.000000e+00 : f32
      %77 = vector.broadcast %cst_43 : f32 to vector<2x2xf32>
      %78 = arith.mulf %76, %77 : vector<2x2xf32>
      %79 = math.exp %78 : vector<2x2xf32>
      %cst_44 = arith.constant 1.000000e+00 : f32
      %80 = vector.broadcast %cst_44 : f32 to vector<2x2xf32>
      %81 = arith.subf %64, %80 : vector<2x2xf32>
      %cst_45 = arith.constant 2.000000e+00 : f32
      %82 = vector.broadcast %cst_45 : f32 to vector<2x2xf32>
      %83 = arith.mulf %81, %82 : vector<2x2xf32>
      %84 = math.exp %83 : vector<2x2xf32>
      %85 = arith.mulf %48, %56 : vector<2x4xf32>
      %cst_46 = arith.constant dense<0.000000e+00> : vector<2xf32>
      %86 = vector.multi_reduction <add>, %85, %cst_46 [1] : vector<2x4xf32> to vector<2xf32>
      %87 = vector.shape_cast %86 : vector<2xf32> to vector<2x1xf32>
      %cst_47 = arith.constant 1.000000e+00 : f32
      %88 = vector.broadcast %cst_47 : f32 to vector<2x1xf32>
      %89 = arith.subf %87, %88 : vector<2x1xf32>
      %cst_48 = arith.constant 2.000000e+00 : f32
      %90 = vector.broadcast %cst_48 : f32 to vector<2x1xf32>
      %91 = arith.mulf %89, %90 : vector<2x1xf32>
      %cst_49 = arith.constant dense<0.000000e+00> : vector<2xf32>
      %92 = vector.multi_reduction <add>, %69, %cst_49 [1] : vector<2x2xf32> to vector<2xf32>
      %93 = vector.shape_cast %92 : vector<2xf32> to vector<2x1xf32>
      %cst_50 = arith.constant dense<0.000000e+00> : vector<2xf32>
      %94 = vector.multi_reduction <add>, %79, %cst_50 [1] : vector<2x2xf32> to vector<2xf32>
      %95 = vector.shape_cast %94 : vector<2xf32> to vector<2x1xf32>
      %96 = arith.addf %93, %95 : vector<2x1xf32>
      %cst_51 = arith.constant 1.000000e+00 : f32
      %97 = vector.broadcast %cst_51 : f32 to vector<2x1xf32>
      %98 = arith.subf %96, %97 : vector<2x1xf32>
      %cst_52 = arith.constant dense<0.000000e+00> : vector<2xf32>
      %99 = vector.multi_reduction <add>, %74, %cst_52 [1] : vector<2x2xf32> to vector<2xf32>
      %100 = vector.shape_cast %99 : vector<2xf32> to vector<2x1xf32>
      %cst_53 = arith.constant dense<0.000000e+00> : vector<2xf32>
      %101 = vector.multi_reduction <add>, %84, %cst_53 [1] : vector<2x2xf32> to vector<2xf32>
      %102 = vector.shape_cast %101 : vector<2xf32> to vector<2x1xf32>
      %103 = arith.addf %100, %102 : vector<2x1xf32>
      %cst_54 = arith.constant 1.000000e+00 : f32
      %104 = vector.broadcast %cst_54 : f32 to vector<2x1xf32>
      %105 = arith.subf %103, %104 : vector<2x1xf32>
      %106 = math.log %98 : vector<2x1xf32>
      %107 = math.log %105 : vector<2x1xf32>
      %108 = arith.addf %106, %107 : vector<2x1xf32>
      %cst_55 = arith.constant 2.000000e+00 : f32
      %109 = vector.broadcast %cst_55 : f32 to vector<2x1xf32>
      %110 = arith.mulf %109, %91 : vector<2x1xf32>
      %111 = arith.subf %108, %110 : vector<2x1xf32>
      %c0_56 = arith.constant 0 : index
      %c0_57 = arith.constant 0 : index
      %112 = vector.load %arg8[%c0_56, %c0_57] : memref<2x256xf32, #tpu.memory_space<vmem>>, vector<2x256xf32>
      %c0_58 = arith.constant 0 : index
      %c0_59 = arith.constant 0 : index
      %113 = vector.load %arg9[%c0_58, %c0_59] : memref<2x256xf32, #tpu.memory_space<vmem>>, vector<2x256xf32>
      %114 = arith.mulf %112, %112 : vector<2x256xf32>
      %cst_60 = arith.constant dense<0.000000e+00> : vector<2xf32>
      %115 = vector.multi_reduction <add>, %114, %cst_60 [1] : vector<2x256xf32> to vector<2xf32>
      %116 = vector.shape_cast %115 : vector<2xf32> to vector<2x1xf32>
      %117 = math.sqrt %116 : vector<2x1xf32>
      %cst_61 = arith.constant 9.99999996E-13 : f32
      %118 = vector.broadcast %cst_61 : f32 to vector<2x1xf32>
      %119 = arith.maximumf %117, %118 : vector<2x1xf32>
      %120 = vector.broadcast %119 : vector<2x1xf32> to vector<2x256xf32>
      %121 = arith.divf %112, %120 : vector<2x256xf32>
      %122 = arith.mulf %113, %113 : vector<2x256xf32>
      %cst_62 = arith.constant dense<0.000000e+00> : vector<2xf32>
      %123 = vector.multi_reduction <add>, %122, %cst_62 [1] : vector<2x256xf32> to vector<2xf32>
      %124 = vector.shape_cast %123 : vector<2xf32> to vector<2x1xf32>
      %125 = math.sqrt %124 : vector<2x1xf32>
      %cst_63 = arith.constant 9.99999996E-13 : f32
      %126 = vector.broadcast %cst_63 : f32 to vector<2x1xf32>
      %127 = arith.maximumf %125, %126 : vector<2x1xf32>
      %128 = vector.broadcast %127 : vector<2x1xf32> to vector<2x256xf32>
      %129 = arith.divf %113, %128 : vector<2x256xf32>
      %130 = tpu.transpose %121, [1, 0] : vector<2x256xf32> -> vector<256x2xf32>
      %cst_64 = arith.constant dense<0.000000e+00> : vector<2x2xf32>
      %131 = tpu.matmul %121, %130, %cst_64 {dimension_numbers = #tpu.dot_dimension_numbers<[1], [0], [0], [1], [0, 0, 1, 1], [], []>} : vector<2x256xf32>, vector<256x2xf32>, vector<2x2xf32> -> vector<2x2xf32>
      %132 = tpu.transpose %129, [1, 0] : vector<2x256xf32> -> vector<256x2xf32>
      %cst_65 = arith.constant dense<0.000000e+00> : vector<2x2xf32>
      %133 = tpu.matmul %129, %132, %cst_65 {dimension_numbers = #tpu.dot_dimension_numbers<[1], [0], [0], [1], [0, 0, 1, 1], [], []>} : vector<2x256xf32>, vector<256x2xf32>, vector<2x2xf32> -> vector<2x2xf32>
      %134 = tpu.transpose %129, [1, 0] : vector<2x256xf32> -> vector<256x2xf32>
      %cst_66 = arith.constant dense<0.000000e+00> : vector<2x2xf32>
      %135 = tpu.matmul %121, %134, %cst_66 {dimension_numbers = #tpu.dot_dimension_numbers<[1], [0], [0], [1], [0, 0, 1, 1], [], []>} : vector<2x256xf32>, vector<256x2xf32>, vector<2x2xf32> -> vector<2x2xf32>
      %136 = tpu.transpose %121, [1, 0] : vector<2x256xf32> -> vector<256x2xf32>
      %cst_67 = arith.constant dense<0.000000e+00> : vector<2x2xf32>
      %137 = tpu.matmul %129, %136, %cst_67 {dimension_numbers = #tpu.dot_dimension_numbers<[1], [0], [0], [1], [0, 0, 1, 1], [], []>} : vector<2x256xf32>, vector<256x2xf32>, vector<2x2xf32> -> vector<2x2xf32>
      %cst_68 = arith.constant 1.000000e+00 : f32
      %138 = vector.broadcast %cst_68 : f32 to vector<2x2xf32>
      %139 = arith.subf %131, %138 : vector<2x2xf32>
      %cst_69 = arith.constant 2.000000e+00 : f32
      %140 = vector.broadcast %cst_69 : f32 to vector<2x2xf32>
      %141 = arith.mulf %139, %140 : vector<2x2xf32>
      %142 = math.exp %141 : vector<2x2xf32>
      %cst_70 = arith.constant 1.000000e+00 : f32
      %143 = vector.broadcast %cst_70 : f32 to vector<2x2xf32>
      %144 = arith.subf %133, %143 : vector<2x2xf32>
      %cst_71 = arith.constant 2.000000e+00 : f32
      %145 = vector.broadcast %cst_71 : f32 to vector<2x2xf32>
      %146 = arith.mulf %144, %145 : vector<2x2xf32>
      %147 = math.exp %146 : vector<2x2xf32>
      %cst_72 = arith.constant 1.000000e+00 : f32
      %148 = vector.broadcast %cst_72 : f32 to vector<2x2xf32>
      %149 = arith.subf %135, %148 : vector<2x2xf32>
      %cst_73 = arith.constant 2.000000e+00 : f32
      %150 = vector.broadcast %cst_73 : f32 to vector<2x2xf32>
      %151 = arith.mulf %149, %150 : vector<2x2xf32>
      %152 = math.exp %151 : vector<2x2xf32>
      %cst_74 = arith.constant 1.000000e+00 : f32
      %153 = vector.broadcast %cst_74 : f32 to vector<2x2xf32>
      %154 = arith.subf %137, %153 : vector<2x2xf32>
      %cst_75 = arith.constant 2.000000e+00 : f32
      %155 = vector.broadcast %cst_75 : f32 to vector<2x2xf32>
      %156 = arith.mulf %154, %155 : vector<2x2xf32>
      %157 = math.exp %156 : vector<2x2xf32>
      %158 = arith.mulf %121, %129 : vector<2x256xf32>
      %cst_76 = arith.constant dense<0.000000e+00> : vector<2xf32>
      %159 = vector.multi_reduction <add>, %158, %cst_76 [1] : vector<2x256xf32> to vector<2xf32>
      %160 = vector.shape_cast %159 : vector<2xf32> to vector<2x1xf32>
      %cst_77 = arith.constant 1.000000e+00 : f32
      %161 = vector.broadcast %cst_77 : f32 to vector<2x1xf32>
      %162 = arith.subf %160, %161 : vector<2x1xf32>
      %cst_78 = arith.constant 2.000000e+00 : f32
      %163 = vector.broadcast %cst_78 : f32 to vector<2x1xf32>
      %164 = arith.mulf %162, %163 : vector<2x1xf32>
      %cst_79 = arith.constant dense<0.000000e+00> : vector<2xf32>
      %165 = vector.multi_reduction <add>, %142, %cst_79 [1] : vector<2x2xf32> to vector<2xf32>
      %166 = vector.shape_cast %165 : vector<2xf32> to vector<2x1xf32>
      %cst_80 = arith.constant dense<0.000000e+00> : vector<2xf32>
      %167 = vector.multi_reduction <add>, %152, %cst_80 [1] : vector<2x2xf32> to vector<2xf32>
      %168 = vector.shape_cast %167 : vector<2xf32> to vector<2x1xf32>
      %169 = arith.addf %166, %168 : vector<2x1xf32>
      %cst_81 = arith.constant 1.000000e+00 : f32
      %170 = vector.broadcast %cst_81 : f32 to vector<2x1xf32>
      %171 = arith.subf %169, %170 : vector<2x1xf32>
      %cst_82 = arith.constant dense<0.000000e+00> : vector<2xf32>
      %172 = vector.multi_reduction <add>, %147, %cst_82 [1] : vector<2x2xf32> to vector<2xf32>
      %173 = vector.shape_cast %172 : vector<2xf32> to vector<2x1xf32>
      %cst_83 = arith.constant dense<0.000000e+00> : vector<2xf32>
      %174 = vector.multi_reduction <add>, %157, %cst_83 [1] : vector<2x2xf32> to vector<2xf32>
      %175 = vector.shape_cast %174 : vector<2xf32> to vector<2x1xf32>
      %176 = arith.addf %173, %175 : vector<2x1xf32>
      %cst_84 = arith.constant 1.000000e+00 : f32
      %177 = vector.broadcast %cst_84 : f32 to vector<2x1xf32>
      %178 = arith.subf %176, %177 : vector<2x1xf32>
      %179 = math.log %171 : vector<2x1xf32>
      %180 = math.log %178 : vector<2x1xf32>
      %181 = arith.addf %179, %180 : vector<2x1xf32>
      %cst_85 = arith.constant 2.000000e+00 : f32
      %182 = vector.broadcast %cst_85 : f32 to vector<2x1xf32>
      %183 = arith.mulf %182, %164 : vector<2x1xf32>
      %184 = arith.subf %181, %183 : vector<2x1xf32>
      %185 = arith.addf %111, %184 : vector<2x1xf32>
      %cst_86 = arith.constant 5.000000e-01 : f32
      %186 = vector.broadcast %cst_86 : f32 to vector<2x1xf32>
      %187 = arith.mulf %185, %186 : vector<2x1xf32>
      %c0_87 = arith.constant 0 : index
      %c0_88 = arith.constant 0 : index
      %188 = vector.load %arg5[%c0_87, %c0_88] : memref<2x1xf32, #tpu.memory_space<vmem>>, vector<2x1xf32>
      tpu.vector_store %arg5[%c0_87, %c0_88], %187 {strides = array<i32>} : memref<2x1xf32, #tpu.memory_space<vmem>>, vector<2x1xf32>,
    } else {
    }
    return
  }
  func.func @transform_0(%arg0: i32) -> (i32, i32, i32) {
    %c0_i32 = arith.constant 0 : i32
    %c0_i32_0 = arith.constant 0 : i32
    %c0_i32_1 = arith.constant 0 : i32
    return %c0_i32, %c0_i32_0, %arg0 : i32, i32, i32
  }
  func.func @transform_1(%arg0: i32) -> (i32, i32, i32) {
    %c0_i32 = arith.constant 0 : i32
    %c0_i32_0 = arith.constant 0 : i32
    %c0_i32_1 = arith.constant 0 : i32
    return %c0_i32, %c0_i32_0, %arg0 : i32, i32, i32
  }
  func.func @transform_2(%arg0: i32) -> (i32, i32) {
    %c0_i32 = arith.constant 0 : i32
    %c0_i32_0 = arith.constant 0 : i32
    %c0_i32_1 = arith.constant 0 : i32
    return %c0_i32, %c0_i32_0 : i32, i32
  }
  func.func @transform_3(%arg0: i32) -> i32 {
    %c0_i32 = arith.constant 0 : i32
    %c0_i32_0 = arith.constant 0 : i32
    return %c0_i32 : i32
  }
  func.func @transform_4(%arg0: i32) -> (i32, i32) {
    %c0_i32 = arith.constant 0 : i32
    %c0_i32_0 = arith.constant 0 : i32
    %c0_i32_1 = arith.constant 0 : i32
    return %c0_i32, %c0_i32_0 : i32, i32
  }
}

</mosaic_0001>

<llo_original>
// kernel: tpu_custom_call.1
$region0: #{tpu_custom_call.1}
  #allocation0 [shape = 'u32[]', space=smem, size = 0x4, offset = 0x4, fixed_abs, tag = 'smem constant byte address 0x4 - core index']
  #allocation1 [shape = 'u32[144,128]{1,0:T(1,128)}', space=vmem, size = 0x12000, scoped, tag = 'internal scratch']
  #allocation2 [shape = 'f32[2,4]{1,0:T(2,128)}', space=vmem, size = 0x400, scoped, tag = 'scratch operand']
  #allocation3 [shape = 'f32[2,4]{1,0:T(2,128)}', space=vmem, size = 0x400, scoped, tag = 'scratch operand']
  #allocation4 [shape = 'f32[2,256]{1,0:T(2,128)}', space=vmem, size = 0x800, scoped, tag = 'scratch operand']
  #allocation5 [shape = 'f32[2,256]{1,0:T(2,128)}', space=vmem, size = 0x800, scoped, tag = 'scratch operand']
  #allocation6 [shape = 'f32[1]{0:T(128)S(6)}', space=smem, size = 0x200, scoped, tag = 'scoped memory for tpu_custom_call.1']
  %s0 = inlined_call_operand.hbm [shape: f32[2,4,256], index: 0, kind: input, shape index: {}]
  %s1 = inlined_call_operand.hbm [shape: f32[2,4,256], index: 1, kind: input, shape index: {}]
  %s2 = inlined_call_operand.vmem [shape: f32[1,4], index: 2, kind: input, shape index: {}]
  %s3 = inlined_call_operand.<no memory space> [shape: f32[1], index: 3, kind: input, shape index: {}]
  %s4 = inlined_call_operand.vmem [shape: f32[2,1], index: 4, kind: output, shape index: {}]
  %s5 = sld [smem:[#allocation0]]
  $region42: #{tpu_custom_call.1} parent=0
    _
  %s7 = ssub.s32 1, %s5
  %s8 = scalar_select 0, %s7, %s5
  %9 = sst [smem:[#allocation6]] %s3
  $region1: #{tpu_custom_call.1} parent=0
    #allocation7 [shape = 'u8[8192]{0}', space=vmem, size = 0x2000, scoped, tag = 'input window, operand 0, single buffered']
    #allocation8 [shape = 's32[1]{0}', space=sflag, size = 0x4, scoped, tag = 'scoped memory for tpu_custom_call.1']
    #allocation9 [shape = 'u8[8192]{0}', space=vmem, size = 0x2000, scoped, tag = 'input window, operand 1, single buffered']
    #allocation10 [shape = 's32[1]{0}', space=sflag, size = 0x4, scoped, tag = 'scoped memory for tpu_custom_call.1']
    %10 = vsyncpa [#allocation8], 0
    %11 = vsyncpa [#allocation10], 0
    // Predicated region
    $region2: #{tpu_custom_call.1} parent=1 // pred_check
      _
    $region3: #{tpu_custom_call.1} parent=1 // pred_check_branch
      %13 = sbr.rel (0) target = $region5
    $region4: #{tpu_custom_call.1} parent=1 // pred_region
      %s15 = ssub.s32 256, 256
      %16 = vsyncadd [#allocation8], %s15
      %s17 = sshll.u32 [#allocation7], 4
      %s18 = int_to_ptr.vmem [resolvable:$true] %s17
      %23 = dma.hbm_to_vmem [thread:$0]  %s0, 256, %s18, [#allocation8], 128, 128, 8
    $region5: #{tpu_custom_call.1} parent=1 // pred_fallthru
      _
    // Predicated region
    $region6: #{tpu_custom_call.1} parent=1 // pred_check
      _
    $region7: #{tpu_custom_call.1} parent=1 // pred_check_branch
      %25 = sbr.rel (0) target = $region9
    $region8: #{tpu_custom_call.1} parent=1 // pred_region
      %s27 = ssub.s32 256, 256
      %28 = vsyncadd [#allocation10], %s27
      %s29 = sshll.u32 [#allocation9], 4
      %s30 = int_to_ptr.vmem [resolvable:$true] %s29
      %35 = dma.hbm_to_vmem [thread:$0]  %s1, 256, %s30, [#allocation10], 128, 128, 8
    $region9: #{tpu_custom_call.1} parent=1 // pred_fallthru
      _
    // Predicated region
    $region10: #{tpu_custom_call.1} parent=1 // pred_check
      _
    $region11: #{tpu_custom_call.1} parent=1 // pred_check_branch
      %37 = sbr.rel (0) target = $region13
    $region12: #{tpu_custom_call.1} parent=1 // pred_region
      _
    $region13: #{tpu_custom_call.1} parent=1 // pred_fallthru
      _
    // Predicated region
    $region14: #{tpu_custom_call.1} parent=1 // pred_check
      _
    $region15: #{tpu_custom_call.1} parent=1 // pred_check_branch
      %39 = sbr.rel (0) target = $region17
    $region16: #{tpu_custom_call.1} parent=1 // pred_region
      _
    $region17: #{tpu_custom_call.1} parent=1 // pred_fallthru
      _
    // Predicated region
    $region18: #{tpu_custom_call.1} parent=1 // pred_check
      _
    $region19: #{tpu_custom_call.1} parent=1 // pred_check_branch
      %41 = sbr.rel (0) target = $region21
    $region20: #{tpu_custom_call.1} parent=1 // pred_region
      %42 = dma.done [#allocation8], 256
    $region21: #{tpu_custom_call.1} parent=1 // pred_fallthru
      _
    // Predicated region
    $region22: #{tpu_custom_call.1} parent=1 // pred_check
      _
    $region23: #{tpu_custom_call.1} parent=1 // pred_check_branch
      %44 = sbr.rel (0) target = $region25
    $region24: #{tpu_custom_call.1} parent=1 // pred_region
      %45 = dma.done [#allocation10], 256
    $region25: #{tpu_custom_call.1} parent=1 // pred_fallthru
      _
    %v46 = vld [vmem:[#allocation7] sm:$0xff]
    %v47 = vld [vmem:[#allocation7 + $0x8] sm:$0xff]
    %v48 = vld [vmem:[#allocation9] sm:$0xff]
    %v49 = vld [vmem:[#allocation9 + $0x8] sm:$0xff]
    %v50 = vld [vmem:[%s2] sm:$0x1]
    %s51 = sld [smem:[#allocation6]]
    %p52 = scmp.eq.s32.totalorder 0, 0
    // Predicated region
    $region26: #{tpu_custom_call.1} parent=1 // pred_check
      %p53 = pneg %p52
    $region27: #{tpu_custom_call.1} parent=1 // pred_check_branch
      %55 = sbr.rel (%p53) target = $region29
    $region28: #{tpu_custom_call.1} parent=1 // pred_region
      %vm56 = vcmask 25600
      %57 = vst.msk [vmem:[#allocation2] sm:$0x3] %vm56, 0.0
      %58 = vst.msk [vmem:[#allocation3] sm:$0x3] %vm56, 0.0
    $region29: #{tpu_custom_call.1} parent=1 // pred_fallthru
      _
    %v59 = vld [vmem:[#allocation2] sm:$0x3]
    %v62 = vcombine.high %v46, %v46
    %v63 = vcombine.high %v47, %v47
    %vm66 = vcmask 1043456
    %v67 = vsel %vm66, %v46, 0.0
    %v68 = vsel %vm66, %v62, 0.0
    %v69 = vadd.f32 %v67, %v68
    %70 = vadd.xlane.f32.xlu0 %v69
    %v71 = vpop.xlane.xlu0 %70
    %v72 = vsel %vm66, %v47, 0.0
    %v73 = vsel %vm66, %v63, 0.0
    %v74 = vadd.f32 %v72, %v73
    %75 = vadd.xlane.f32.xlu0 %v74
    %v76 = vpop.xlane.xlu0 %75
    %v77 = vmul.f32 %v71, 0.00390625
    %v78 = vmul.f32 %v76, 0.00390625
    %v81 = vlaneseq
    %v82 = vand.u32 %v81, 127
    %v83 = vlaneseq
    %v84 = vshrl.u32 %v83, 7
    %v85 = vsub.s32 %v82, %v84
    %v86 = vrot.slane %v77, %v85
    %v87 = vlaneseq
    %v88 = vshrl.u32 %v87, 7
    %v89 = vsub.s32 %v82, %v88
    %v90 = vrot.slane %v78, %v89
    %vm91 = vcmask 1041409
    %v92 = vsel %vm91, %v90, %v86
    %v94 = vadd.f32 %v59, %v92
    %vm95 = vcmask 25600
    %96 = vst.msk [vmem:[#allocation2] sm:$0x3] %vm95, %v94
    %v97 = vld [vmem:[#allocation3] sm:$0x3]
    %v100 = vcombine.high %v48, %v48
    %v101 = vcombine.high %v49, %v49
    %v104 = vsel %vm66, %v48, 0.0
    %v105 = vsel %vm66, %v100, 0.0
    %v106 = vadd.f32 %v104, %v105
    %107 = vadd.xlane.f32.xlu0 %v106
    %v108 = vpop.xlane.xlu0 %107
    %v109 = vsel %vm66, %v49, 0.0
    %v110 = vsel %vm66, %v101, 0.0
    %v111 = vadd.f32 %v109, %v110
    %112 = vadd.xlane.f32.xlu0 %v111
    %v113 = vpop.xlane.xlu0 %112
    %v114 = vmul.f32 %v108, 0.00390625
    %v115 = vmul.f32 %v113, 0.00390625
    %v118 = vlaneseq
    %v119 = vshrl.u32 %v118, 7
    %v120 = vsub.s32 %v82, %v119
    %v121 = vrot.slane %v114, %v120
    %v122 = vlaneseq
    %v123 = vshrl.u32 %v122, 7
    %v124 = vsub.s32 %v82, %v123
    %v125 = vrot.slane %v115, %v124
    %v126 = vsel %vm91, %v125, %v121
    %v128 = vadd.f32 %v97, %v126
    %129 = vst.msk [vmem:[#allocation3] sm:$0x3] %vm95, %v128
    %v130 = vlaneseq
    %v131 = vshrl.u32 %v130, 7
    %v132 = vsub.s32 0, %v131
    %v133 = vrot.slane %v50, %v132
    %135 = vbcast.lane.b32.xlu0 %v133, 256
    %v136 = vpop.permute.xlu0 %135
    %s137 = smul.u32 0, 256
    %v140 = vunpack.c.l.s4 839922192
    %v141 = vunpack.c.0.s8 %v140
    %v142 = vlaneseq
    %v143 = vshrl.u32 %v142, 7
    %v144 = vsub.s32 %v141, %v143
    %v145 = vrot.slane %v136, %v144
    %v147 = vmul.f32 %v46, %v145
    %v148 = vmul.f32 %v47, %v145
    %v151 = vcombine.high %v147, %v147
    %v152 = vcombine.high %v148, %v148
    %v155 = vsel %vm66, %v147, 0.0
    %v156 = vrot.slane %v155, 4
    %v157 = vadd.f32 %v155, %v156
    %v158 = vrot.slane %v157, 2
    %v159 = vadd.f32 %v157, %v158
    %v160 = vrot.slane %v159, 1
    %v161 = vadd.f32 %v159, %v160
    %v162 = vsel %vm66, %v151, 0.0
    %v163 = vrot.slane %v162, 4
    %v164 = vadd.f32 %v162, %v163
    %v165 = vrot.slane %v164, 2
    %v166 = vadd.f32 %v164, %v165
    %v167 = vrot.slane %v166, 1
    %v168 = vadd.f32 %v166, %v167
    %v169 = vsel %vm66, %v148, 0.0
    %v170 = vrot.slane %v169, 4
    %v171 = vadd.f32 %v169, %v170
    %v172 = vrot.slane %v171, 2
    %v173 = vadd.f32 %v171, %v172
    %v174 = vrot.slane %v173, 1
    %v175 = vadd.f32 %v173, %v174
    %v176 = vsel %vm66, %v152, 0.0
    %v177 = vrot.slane %v176, 4
    %v178 = vadd.f32 %v176, %v177
    %v179 = vrot.slane %v178, 2
    %v180 = vadd.f32 %v178, %v179
    %v181 = vrot.slane %v180, 1
    %v182 = vadd.f32 %v180, %v181
    %v183 = vstv %s51
    %v184 = vadd.f32 %v161, %v183
    %v185 = vadd.f32 %v168, %v183
    %v186 = vadd.f32 %v175, %v183
    %v187 = vadd.f32 %v182, %v183
    %v192 = vcombine.low %v184, %v185
    %v194 = vunpack.c.l.s4 1983009808
    %v195 = vunpack.c.0.s8 %v194
    %v196 = vlaneseq
    %v197 = vshrl.u32 %v196, 7
    %v198 = vsub.s32 %v195, %v197
    %v199 = vrot.slane %v192, %v198
    %v200 = vcombine.low %v186, %v187
    %v202 = vunpack.c.l.s4 1983009808
    %v203 = vunpack.c.0.s8 %v202
    %v204 = vlaneseq
    %v205 = vshrl.u32 %v204, 7
    %v206 = vsub.s32 %v203, %v205
    %v207 = vrot.slane %v200, %v206
    %vm208 = vcmask 1044484
    %v209 = vsel %vm208, %v199, %v199
    %vm210 = vcmask 1046534
    %v211 = vsel %vm210, %v199, %v209
    %v212 = vrot.slane %v207, 7
    %v213 = vsel %vm91, %v212, %v211
    %vm214 = vcmask 1043459
    %v215 = vsel %vm214, %v212, %v213
    %vm216 = vcmask 1045509
    %v217 = vsel %vm216, %v212, %v215
    %vm218 = vcmask 1047559
    %v219 = vsel %vm218, %v212, %v217
    %s221 = sshra.s32 %s137, 7
    %s222 = sand.u32 %s137, 127
    %s223 = smul.addr %s221, 2
    %s224 = scalar_lea.vmem [#allocation4], %s223
    %225 = vst [vmem:[%s224] sm:$0xf] %v219
    %v226 = vmul.f32 %v48, %v145
    %v227 = vmul.f32 %v49, %v145
    %v230 = vcombine.high %v226, %v226
    %v231 = vcombine.high %v227, %v227
    %v234 = vsel %vm66, %v226, 0.0
    %v235 = vrot.slane %v234, 4
    %v236 = vadd.f32 %v234, %v235
    %v237 = vrot.slane %v236, 2
    %v238 = vadd.f32 %v236, %v237
    %v239 = vrot.slane %v238, 1
    %v240 = vadd.f32 %v238, %v239
    %v241 = vsel %vm66, %v230, 0.0
    %v242 = vrot.slane %v241, 4
    %v243 = vadd.f32 %v241, %v242
    %v244 = vrot.slane %v243, 2
    %v245 = vadd.f32 %v243, %v244
    %v246 = vrot.slane %v245, 1
    %v247 = vadd.f32 %v245, %v246
    %v248 = vsel %vm66, %v227, 0.0
    %v249 = vrot.slane %v248, 4
    %v250 = vadd.f32 %v248, %v249
    %v251 = vrot.slane %v250, 2
    %v252 = vadd.f32 %v250, %v251
    %v253 = vrot.slane %v252, 1
    %v254 = vadd.f32 %v252, %v253
    %v255 = vsel %vm66, %v231, 0.0
    %v256 = vrot.slane %v255, 4
    %v257 = vadd.f32 %v255, %v256
    %v258 = vrot.slane %v257, 2
    %v259 = vadd.f32 %v257, %v258
    %v260 = vrot.slane %v259, 1
    %v261 = vadd.f32 %v259, %v260
    %v262 = vadd.f32 %v240, %v183
    %v263 = vadd.f32 %v247, %v183
    %v264 = vadd.f32 %v254, %v183
    %v265 = vadd.f32 %v261, %v183
    %v270 = vcombine.low %v262, %v263
    %v272 = vunpack.c.l.s4 1983009808
    %v273 = vunpack.c.0.s8 %v272
    %v274 = vlaneseq
    %v275 = vshrl.u32 %v274, 7
    %v276 = vsub.s32 %v273, %v275
    %v277 = vrot.slane %v270, %v276
    %v278 = vcombine.low %v264, %v265
    %v280 = vunpack.c.l.s4 1983009808
    %v281 = vunpack.c.0.s8 %v280
    %v282 = vlaneseq
    %v283 = vshrl.u32 %v282, 7
    %v284 = vsub.s32 %v281, %v283
    %v285 = vrot.slane %v278, %v284
    %v286 = vsel %vm208, %v277, %v277
    %v287 = vsel %vm210, %v277, %v286
    %v288 = vrot.slane %v285, 7
    %v289 = vsel %vm91, %v288, %v287
    %v290 = vsel %vm214, %v288, %v289
    %v291 = vsel %vm216, %v288, %v290
    %v292 = vsel %vm218, %v288, %v291
    %s294 = smul.addr %s221, 2
    %s295 = scalar_lea.vmem [#allocation5], %s294
    %296 = vst [vmem:[%s295] sm:$0xf] %v292
    // Predicated region
    $region30: #{tpu_custom_call.1} parent=1 // pred_check
      %p297 = pneg %p52
    $region31: #{tpu_custom_call.1} parent=1 // pred_check_branch
      %299 = sbr.rel (%p297) target = $region33
    $region32: #{tpu_custom_call.1} parent=1 // pred_region
      %v300 = vld [vmem:[#allocation2] sm:$0x3]
      %v301 = vld [vmem:[#allocation3] sm:$0x3]
      %v302 = vmul.f32 %v300, %v300
      %v303 = vsel %vm95, %v302, 0.0
      %304 = vadd.xlane.f32.xlu0 %v303
      %v305 = vpop.xlane.xlu0 %304
      %v306 = vrsqrt.pop %v305
      %v307 = vmul.f32 %v305, %v306
      %vm308 = vcmp.eq.f32.partialorder %v305, inf
      %v309 = vsel %vm308, %v305, %v307
      %vm310 = vcmp.eq.f32.partialorder %v305, 0.0
      %v311 = vand.u32 %v305, 2147483648
      %v312 = vsel %vm310, %v311, %v309
      %v313 = vmax.f32 %v312, 1e-12
      %v314 = vrcp.pop %v313
      %v315 = vmul.f32 %v300, %v314
      %v316 = vmul.f32 %v301, %v301
      %v317 = vsel %vm95, %v316, 0.0
      %318 = vadd.xlane.f32.xlu0 %v317
      %v319 = vpop.xlane.xlu0 %318
      %v320 = vrsqrt.pop %v319
      %v321 = vmul.f32 %v319, %v320
      %vm322 = vcmp.eq.f32.partialorder %v319, inf
      %v323 = vsel %vm322, %v319, %v321
      %vm324 = vcmp.eq.f32.partialorder %v319, 0.0
      %v325 = vand.u32 %v319, 2147483648
      %v326 = vsel %vm324, %v325, %v323
      %v327 = vmax.f32 %v326, 1e-12
      %v328 = vrcp.pop %v327
      %v329 = vmul.f32 %v301, %v328
      %vm330 = vcmask 31744
      %v332 = vsel %vm330, %v315, 0
      %334 = vmatprep.subr.mxu0 0.0
      %335 = vmatpush1.xpose.msra.mxu0 %v332
      %336 = vmatprep.subr.mxu0 0.0
      %337 = vmatpush1.xpose.msra.mxu0 0.0
      %338 = vmatprep.subr.mxu0 0.0
      %339 = vmatpush1.xpose.msra.mxu0 0.0
      %340 = vmatprep.subr.mxu0 0.0
      %341 = vmatpush1.xpose.msra.mxu0 0.0
      %342 = vmatprep.subr.mxu0 0.0
      %343 = vmatpush1.xpose.msra.mxu0 0.0
      %344 = vmatprep.subr.mxu0 0.0
      %345 = vmatpush1.xpose.msra.mxu0 0.0
      %346 = vmatprep.subr.mxu0 0.0
      %347 = vmatpush1.xpose.msra.mxu0 0.0
      %348 = vmatprep.subr.mxu0 0.0
      %349 = vmatpush1.xpose.msra.mxu0 0.0
      %350 = vmatprep.subr.mxu0 0.0
      %351 = vmatpush1.xpose.msra.mxu0 0.0
      %352 = vmatprep.subr.mxu0 0.0
      %353 = vmatpush1.xpose.msra.mxu0 0.0
      %354 = vmatprep.subr.mxu0 0.0
      %355 = vmatpush1.xpose.msra.mxu0 0.0
      %356 = vmatprep.subr.mxu0 0.0
      %357 = vmatpush1.xpose.msra.mxu0 0.0
      %358 = vmatprep.subr.mxu0 0.0
      %359 = vmatpush1.xpose.msra.mxu0 0.0
      %360 = vmatprep.subr.mxu0 0.0
      %361 = vmatpush1.xpose.msra.mxu0 0.0
      %362 = vmatprep.subr.mxu0 0.0
      %363 = vmatpush1.xpose.msra.mxu0 0.0
      %364 = vmatprep.subr.mxu0 0.0
      %365 = vmatpush1.xpose.msra.mxu0 0.0
      %366 = vmatprep.subr.mxu0 0.0
      %367 = vmatpush1.xpose.msra.mxu0 0.0
      %368 = vmatprep.subr.mxu0 0.0
      %369 = vmatpush1.xpose.msra.mxu0 0.0
      %370 = vmatprep.subr.mxu0 0.0
      %371 = vmatpush1.xpose.msra.mxu0 0.0
      %372 = vmatprep.subr.mxu0 0.0
      %373 = vmatpush1.xpose.msra.mxu0 0.0
      %374 = vmatprep.subr.mxu0 0.0
      %375 = vmatpush1.xpose.msra.mxu0 0.0
      %376 = vmatprep.subr.mxu0 0.0
      %377 = vmatpush1.xpose.msra.mxu0 0.0
      %378 = vmatprep.subr.mxu0 0.0
      %379 = vmatpush1.xpose.msra.mxu0 0.0
      %380 = vmatprep.subr.mxu0 0.0
      %381 = vmatpush1.xpose.msra.mxu0 0.0
      %382 = vmatprep.subr.mxu0 0.0
      %383 = vmatpush1.xpose.msra.mxu0 0.0
      %384 = vmatprep.subr.mxu0 0.0
      %385 = vmatpush1.xpose.msra.mxu0 0.0
      %386 = vmatprep.subr.mxu0 0.0
      %387 = vmatpush1.xpose.msra.mxu0 0.0
      %388 = vmatprep.subr.mxu0 0.0
      %389 = vmatpush1.xpose.msra.mxu0 0.0
      %390 = vmatprep.subr.mxu0 0.0
      %391 = vmatpush1.xpose.msra.mxu0 0.0
      %392 = vmatprep.subr.mxu0 0.0
      %393 = vmatpush1.xpose.msra.mxu0 0.0
      %394 = vmatprep.subr.mxu0 0.0
      %395 = vmatpush1.xpose.msra.mxu0 0.0
      %396 = vmatprep.subr.mxu0 0.0
      %397 = vmatpush1.xpose.msra.mxu0 0.0
      %398 = vmatprep.mubr.f32.mxu0 0.0
      %399 = vmatmul.mubr.f32.gmra.mrb[0].mxu0 %v332
      %v400 = vpop.f32.mrb[0].mxu0
      %v401 = vadd.f32 0.0, %v400
      %v402 = vpop.f32.mrb[0].mxu0
      %403 = vdwg.mxu0
      %v405 = vsel %vm330, %v329, 0
      %407 = vmatprep.subr.mxu0 0.0
      %408 = vmatpush1.xpose.msra.mxu0 %v405
      %409 = vmatprep.subr.mxu0 0.0
      %410 = vmatpush1.xpose.msra.mxu0 0.0
      %411 = vmatprep.subr.mxu0 0.0
      %412 = vmatpush1.xpose.msra.mxu0 0.0
      %413 = vmatprep.subr.mxu0 0.0
      %414 = vmatpush1.xpose.msra.mxu0 0.0
      %415 = vmatprep.subr.mxu0 0.0
      %416 = vmatpush1.xpose.msra.mxu0 0.0
      %417 = vmatprep.subr.mxu0 0.0
      %418 = vmatpush1.xpose.msra.mxu0 0.0
      %419 = vmatprep.subr.mxu0 0.0
      %420 = vmatpush1.xpose.msra.mxu0 0.0
      %421 = vmatprep.subr.mxu0 0.0
      %422 = vmatpush1.xpose.msra.mxu0 0.0
      %423 = vmatprep.subr.mxu0 0.0
      %424 = vmatpush1.xpose.msra.mxu0 0.0
      %425 = vmatprep.subr.mxu0 0.0
      %426 = vmatpush1.xpose.msra.mxu0 0.0
      %427 = vmatprep.subr.mxu0 0.0
      %428 = vmatpush1.xpose.msra.mxu0 0.0
      %429 = vmatprep.subr.mxu0 0.0
      %430 = vmatpush1.xpose.msra.mxu0 0.0
      %431 = vmatprep.subr.mxu0 0.0
      %432 = vmatpush1.xpose.msra.mxu0 0.0
      %433 = vmatprep.subr.mxu0 0.0
      %434 = vmatpush1.xpose.msra.mxu0 0.0
      %435 = vmatprep.subr.mxu0 0.0
      %436 = vmatpush1.xpose.msra.mxu0 0.0
      %437 = vmatprep.subr.mxu0 0.0
      %438 = vmatpush1.xpose.msra.mxu0 0.0
      %439 = vmatprep.subr.mxu0 0.0
      %440 = vmatpush1.xpose.msra.mxu0 0.0
      %441 = vmatprep.subr.mxu0 0.0
      %442 = vmatpush1.xpose.msra.mxu0 0.0
      %443 = vmatprep.subr.mxu0 0.0
      %444 = vmatpush1.xpose.msra.mxu0 0.0
      %445 = vmatprep.subr.mxu0 0.0
      %446 = vmatpush1.xpose.msra.mxu0 0.0
      %447 = vmatprep.subr.mxu0 0.0
      %448 = vmatpush1.xpose.msra.mxu0 0.0
      %449 = vmatprep.subr.mxu0 0.0
      %450 = vmatpush1.xpose.msra.mxu0 0.0
      %451 = vmatprep.subr.mxu0 0.0
      %452 = vmatpush1.xpose.msra.mxu0 0.0
      %453 = vmatprep.subr.mxu0 0.0
      %454 = vmatpush1.xpose.msra.mxu0 0.0
      %455 = vmatprep.subr.mxu0 0.0
      %456 = vmatpush1.xpose.msra.mxu0 0.0
      %457 = vmatprep.subr.mxu0 0.0
      %458 = vmatpush1.xpose.msra.mxu0 0.0
      %459 = vmatprep.subr.mxu0 0.0
      %460 = vmatpush1.xpose.msra.mxu0 0.0
      %461 = vmatprep.subr.mxu0 0.0
      %462 = vmatpush1.xpose.msra.mxu0 0.0
      %463 = vmatprep.subr.mxu0 0.0
      %464 = vmatpush1.xpose.msra.mxu0 0.0
      %465 = vmatprep.subr.mxu0 0.0
      %466 = vmatpush1.xpose.msra.mxu0 0.0
      %467 = vmatprep.subr.mxu0 0.0
      %468 = vmatpush1.xpose.msra.mxu0 0.0
      %469 = vmatprep.subr.mxu0 0.0
      %470 = vmatpush1.xpose.msra.mxu0 0.0
      %471 = vmatprep.mubr.f32.mxu0 0.0
      %472 = vmatmul.mubr.f32.gmra.mrb[0].mxu0 %v405
      %v473 = vpop.f32.mrb[0].mxu0
      %v474 = vadd.f32 0.0, %v473
      %v475 = vpop.f32.mrb[0].mxu0
      %476 = vdwg.mxu0
      %477 = vmatprep.subr.mxu0 0.0
      %478 = vmatpush1.xpose.msra.mxu0 %v405
      %479 = vmatprep.subr.mxu0 0.0
      %480 = vmatpush1.xpose.msra.mxu0 0.0
      %481 = vmatprep.subr.mxu0 0.0
      %482 = vmatpush1.xpose.msra.mxu0 0.0
      %483 = vmatprep.subr.mxu0 0.0
      %484 = vmatpush1.xpose.msra.mxu0 0.0
      %485 = vmatprep.subr.mxu0 0.0
      %486 = vmatpush1.xpose.msra.mxu0 0.0
      %487 = vmatprep.subr.mxu0 0.0
      %488 = vmatpush1.xpose.msra.mxu0 0.0
      %489 = vmatprep.subr.mxu0 0.0
      %490 = vmatpush1.xpose.msra.mxu0 0.0
      %491 = vmatprep.subr.mxu0 0.0
      %492 = vmatpush1.xpose.msra.mxu0 0.0
      %493 = vmatprep.subr.mxu0 0.0
      %494 = vmatpush1.xpose.msra.mxu0 0.0
      %495 = vmatprep.subr.mxu0 0.0
      %496 = vmatpush1.xpose.msra.mxu0 0.0
      %497 = vmatprep.subr.mxu0 0.0
      %498 = vmatpush1.xpose.msra.mxu0 0.0
      %499 = vmatprep.subr.mxu0 0.0
      %500 = vmatpush1.xpose.msra.mxu0 0.0
      %501 = vmatprep.subr.mxu0 0.0
      %502 = vmatpush1.xpose.msra.mxu0 0.0
      %503 = vmatprep.subr.mxu0 0.0
      %504 = vmatpush1.xpose.msra.mxu0 0.0
      %505 = vmatprep.subr.mxu0 0.0
      %506 = vmatpush1.xpose.msra.mxu0 0.0
      %507 = vmatprep.subr.mxu0 0.0
      %508 = vmatpush1.xpose.msra.mxu0 0.0
      %509 = vmatprep.subr.mxu0 0.0
      %510 = vmatpush1.xpose.msra.mxu0 0.0
      %511 = vmatprep.subr.mxu0 0.0
      %512 = vmatpush1.xpose.msra.mxu0 0.0
      %513 = vmatprep.subr.mxu0 0.0
      %514 = vmatpush1.xpose.msra.mxu0 0.0
      %515 = vmatprep.subr.mxu0 0.0
      %516 = vmatpush1.xpose.msra.mxu0 0.0
      %517 = vmatprep.subr.mxu0 0.0
      %518 = vmatpush1.xpose.msra.mxu0 0.0
      %519 = vmatprep.subr.mxu0 0.0
      %520 = vmatpush1.xpose.msra.mxu0 0.0
      %521 = vmatprep.subr.mxu0 0.0
      %522 = vmatpush1.xpose.msra.mxu0 0.0
      %523 = vmatprep.subr.mxu0 0.0
      %524 = vmatpush1.xpose.msra.mxu0 0.0
      %525 = vmatprep.subr.mxu0 0.0
      %526 = vmatpush1.xpose.msra.mxu0 0.0
      %527 = vmatprep.subr.mxu0 0.0
      %528 = vmatpush1.xpose.msra.mxu0 0.0
      %529 = vmatprep.subr.mxu0 0.0
      %530 = vmatpush1.xpose.msra.mxu0 0.0
      %531 = vmatprep.subr.mxu0 0.0
      %532 = vmatpush1.xpose.msra.mxu0 0.0
      %533 = vmatprep.subr.mxu0 0.0
      %534 = vmatpush1.xpose.msra.mxu0 0.0
      %535 = vmatprep.subr.mxu0 0.0
      %536 = vmatpush1.xpose.msra.mxu0 0.0
      %537 = vmatprep.subr.mxu0 0.0
      %538 = vmatpush1.xpose.msra.mxu0 0.0
      %539 = vmatprep.subr.mxu0 0.0
      %540 = vmatpush1.xpose.msra.mxu0 0.0
      %541 = vmatprep.mubr.f32.mxu0 0.0
      %542 = vmatmul.mubr.f32.gmra.mrb[0].mxu0 %v332
      %v543 = vpop.f32.mrb[0].mxu0
      %v544 = vadd.f32 0.0, %v543
      %v545 = vpop.f32.mrb[0].mxu0
      %546 = vdwg.mxu0
      %547 = vmatprep.subr.mxu0 0.0
      %548 = vmatpush1.xpose.msra.mxu0 %v332
      %549 = vmatprep.subr.mxu0 0.0
      %550 = vmatpush1.xpose.msra.mxu0 0.0
      %551 = vmatprep.subr.mxu0 0.0
      %552 = vmatpush1.xpose.msra.mxu0 0.0
      %553 = vmatprep.subr.mxu0 0.0
      %554 = vmatpush1.xpose.msra.mxu0 0.0
      %555 = vmatprep.subr.mxu0 0.0
      %556 = vmatpush1.xpose.msra.mxu0 0.0
      %557 = vmatprep.subr.mxu0 0.0
      %558 = vmatpush1.xpose.msra.mxu0 0.0
      %559 = vmatprep.subr.mxu0 0.0
      %560 = vmatpush1.xpose.msra.mxu0 0.0
      %561 = vmatprep.subr.mxu0 0.0
      %562 = vmatpush1.xpose.msra.mxu0 0.0
      %563 = vmatprep.subr.mxu0 0.0
      %564 = vmatpush1.xpose.msra.mxu0 0.0
      %565 = vmatprep.subr.mxu0 0.0
      %566 = vmatpush1.xpose.msra.mxu0 0.0
      %567 = vmatprep.subr.mxu0 0.0
      %568 = vmatpush1.xpose.msra.mxu0 0.0
      %569 = vmatprep.subr.mxu0 0.0
      %570 = vmatpush1.xpose.msra.mxu0 0.0
      %571 = vmatprep.subr.mxu0 0.0
      %572 = vmatpush1.xpose.msra.mxu0 0.0
      %573 = vmatprep.subr.mxu0 0.0
      %574 = vmatpush1.xpose.msra.mxu0 0.0
      %575 = vmatprep.subr.mxu0 0.0
      %576 = vmatpush1.xpose.msra.mxu0 0.0
      %577 = vmatprep.subr.mxu0 0.0
      %578 = vmatpush1.xpose.msra.mxu0 0.0
      %579 = vmatprep.subr.mxu0 0.0
      %580 = vmatpush1.xpose.msra.mxu0 0.0
      %581 = vmatprep.subr.mxu0 0.0
      %582 = vmatpush1.xpose.msra.mxu0 0.0
      %583 = vmatprep.subr.mxu0 0.0
      %584 = vmatpush1.xpose.msra.mxu0 0.0
      %585 = vmatprep.subr.mxu0 0.0
      %586 = vmatpush1.xpose.msra.mxu0 0.0
      %587 = vmatprep.subr.mxu0 0.0
      %588 = vmatpush1.xpose.msra.mxu0 0.0
      %589 = vmatprep.subr.mxu0 0.0
      %590 = vmatpush1.xpose.msra.mxu0 0.0
      %591 = vmatprep.subr.mxu0 0.0
      %592 = vmatpush1.xpose.msra.mxu0 0.0
      %593 = vmatprep.subr.mxu0 0.0
      %594 = vmatpush1.xpose.msra.mxu0 0.0
      %595 = vmatprep.subr.mxu0 0.0
      %596 = vmatpush1.xpose.msra.mxu0 0.0
      %597 = vmatprep.subr.mxu0 0.0
      %598 = vmatpush1.xpose.msra.mxu0 0.0
      %599 = vmatprep.subr.mxu0 0.0
      %600 = vmatpush1.xpose.msra.mxu0 0.0
      %601 = vmatprep.subr.mxu0 0.0
      %602 = vmatpush1.xpose.msra.mxu0 0.0
      %603 = vmatprep.subr.mxu0 0.0
      %604 = vmatpush1.xpose.msra.mxu0 0.0
      %605 = vmatprep.subr.mxu0 0.0
      %606 = vmatpush1.xpose.msra.mxu0 0.0
      %607 = vmatprep.subr.mxu0 0.0
      %608 = vmatpush1.xpose.msra.mxu0 0.0
      %609 = vmatprep.subr.mxu0 0.0
      %610 = vmatpush1.xpose.msra.mxu0 0.0
      %611 = vmatprep.mubr.f32.mxu0 0.0
      %612 = vmatmul.mubr.f32.gmra.mrb[0].mxu0 %v405
      %v613 = vpop.f32.mrb[0].mxu0
      %v614 = vadd.f32 0.0, %v613
      %v615 = vpop.f32.mrb[0].mxu0
      %616 = vdwg.mxu0
      %v617 = vsub.f32 %v401, 1.0
      %v618 = vmul.f32 %v617, 2.0
      %v619 = vmul.f32 %v618, 1.442695
      %v620 = vpow.pop %v619
      %v621 = vsub.f32 %v474, 1.0
      %v622 = vmul.f32 %v621, 2.0
      %v623 = vmul.f32 %v622, 1.442695
      %v624 = vpow.pop %v623
      %v625 = vsub.f32 %v544, 1.0
      %v626 = vmul.f32 %v625, 2.0
      %v627 = vmul.f32 %v626, 1.442695
      %v628 = vpow.pop %v627
      %v629 = vsub.f32 %v614, 1.0
      %v630 = vmul.f32 %v629, 2.0
      %v631 = vmul.f32 %v630, 1.442695
      %v632 = vpow.pop %v631
      %v633 = vmul.f32 %v315, %v329
      %v634 = vsel %vm95, %v633, 0.0
      %635 = vadd.xlane.f32.xlu0 %v634
      %v636 = vpop.xlane.xlu0 %635
      %v637 = vsub.f32 %v636, 1.0
      %v638 = vmul.f32 %v637, 2.0
      %vm639 = vcmask 9216
      %v640 = vsel %vm639, %v620, 0.0
      %641 = vadd.xlane.f32.xlu0 %v640
      %v642 = vpop.xlane.xlu0 %641
      %v643 = vsel %vm639, %v628, 0.0
      %644 = vadd.xlane.f32.xlu0 %v643
      %v645 = vpop.xlane.xlu0 %644
      %v646 = vadd.f32 %v642, %v645
      %v647 = vsub.f32 %v646, 1.0
      %v648 = vsel %vm639, %v624, 0.0
      %649 = vadd.xlane.f32.xlu0 %v648
      %v650 = vpop.xlane.xlu0 %649
      %v651 = vsel %vm639, %v632, 0.0
      %652 = vadd.xlane.f32.xlu0 %v651
      %v653 = vpop.xlane.xlu0 %652
      %v654 = vadd.f32 %v650, %v653
      %v655 = vsub.f32 %v654, 1.0
      %v656 = vlog2.pop %v647
      %v657 = vmul.f32 %v656, 0.6931472
      %v658 = vlog2.pop %v655
      %v659 = vmul.f32 %v658, 0.6931472
      %v660 = vadd.f32 %v657, %v659
      %v661 = vmul.f32 %v638, 2.0
      %v662 = vsub.f32 %v660, %v661
      %v663 = vld [vmem:[#allocation4] sm:$0xf]
      %v664 = vld [vmem:[#allocation5] sm:$0xf]
      %v665 = vmul.f32 %v663, %v663
      %v668 = vunpack.c.l.s4 1983009808
      %v669 = vunpack.c.0.s8 %v668
      %v670 = vlaneseq
      %v671 = vshrl.u32 %v670, 7
      %v672 = vsub.s32 %v669, %v671
      %v673 = vrot.slane %v665, %v672
      %v674 = vcombine.high %v673, %v673
      %vm677 = vcmask 1041408
      %v678 = vsel %vm677, %v673, 0.0
      %v679 = vsel %vm677, %v674, 0.0
      %v680 = vadd.f32 %v678, %v679
      %681 = vadd.xlane.f32.xlu0 %v680
      %v682 = vpop.xlane.xlu0 %681
      %v683 = vrsqrt.pop %v682
      %v684 = vmul.f32 %v682, %v683
      %vm685 = vcmp.eq.f32.partialorder %v682, inf
      %v686 = vsel %vm685, %v682, %v684
      %vm687 = vcmp.eq.f32.partialorder %v682, 0.0
      %v688 = vand.u32 %v682, 2147483648
      %v689 = vsel %vm687, %v688, %v686
      %v690 = vmax.f32 %v689, 1e-12
      %v693 = vunpack.c.l.s4 269488144
      %v694 = vunpack.c.0.s8 %v693
      %v695 = vlaneseq
      %v696 = vshrl.u32 %v695, 7
      %v697 = vsub.s32 %v694, %v696
      %v698 = vrot.slane %v690, %v697
      %v700 = vrcp.pop %v698
      %v701 = vmul.f32 %v663, %v700
      %v702 = vmul.f32 %v664, %v664
      %v705 = vunpack.c.l.s4 1983009808
      %v706 = vunpack.c.0.s8 %v705
      %v707 = vlaneseq
      %v708 = vshrl.u32 %v707, 7
      %v709 = vsub.s32 %v706, %v708
      %v710 = vrot.slane %v702, %v709
      %v711 = vcombine.high %v710, %v710
      %v714 = vsel %vm677, %v710, 0.0
      %v715 = vsel %vm677, %v711, 0.0
      %v716 = vadd.f32 %v714, %v715
      %717 = vadd.xlane.f32.xlu0 %v716
      %v718 = vpop.xlane.xlu0 %717
      %v719 = vrsqrt.pop %v718
      %v720 = vmul.f32 %v718, %v719
      %vm721 = vcmp.eq.f32.partialorder %v718, inf
      %v722 = vsel %vm721, %v718, %v720
      %vm723 = vcmp.eq.f32.partialorder %v718, 0.0
      %v724 = vand.u32 %v718, 2147483648
      %v725 = vsel %vm723, %v724, %v722
      %v726 = vmax.f32 %v725, 1e-12
      %v729 = vunpack.c.l.s4 269488144
      %v730 = vunpack.c.0.s8 %v729
      %v731 = vlaneseq
      %v732 = vshrl.u32 %v731, 7
      %v733 = vsub.s32 %v730, %v732
      %v734 = vrot.slane %v726, %v733
      %v736 = vrcp.pop %v734
      %v737 = vmul.f32 %v664, %v736
      %v740 = vunpack.c.l.s4 1983009808
      %v741 = vunpack.c.0.s8 %v740
      %v742 = vlaneseq
      %v743 = vshrl.u32 %v742, 7
      %v744 = vsub.s32 %v741, %v743
      %v745 = vrot.slane %v701, %v744
      %v746 = vcombine.high %v745, %v745
      %749 = vmatprep.subr.mxu0 %v746
      %750 = vmatpush1.xpose.msra.mxu0 %v745
      %751 = vmatprep.subr.mxu0 0.0
      %752 = vmatpush1.xpose.msra.mxu0 0.0
      %753 = vmatprep.subr.mxu0 0.0
      %754 = vmatpush1.xpose.msra.mxu0 0.0
      %755 = vmatprep.subr.mxu0 0.0
      %756 = vmatpush1.xpose.msra.mxu0 0.0
      %757 = vmatprep.subr.mxu0 0.0
      %758 = vmatpush1.xpose.msra.mxu0 0.0
      %759 = vmatprep.subr.mxu0 0.0
      %760 = vmatpush1.xpose.msra.mxu0 0.0
      %761 = vmatprep.subr.mxu0 0.0
      %762 = vmatpush1.xpose.msra.mxu0 0.0
      %763 = vmatprep.subr.mxu0 0.0
      %764 = vmatpush1.xpose.msra.mxu0 0.0
      %765 = vmatprep.subr.mxu0 0.0
      %766 = vmatpush1.xpose.msra.mxu0 0.0
      %767 = vmatprep.subr.mxu0 0.0
      %768 = vmatpush1.xpose.msra.mxu0 0.0
      %769 = vmatprep.subr.mxu0 0.0
      %770 = vmatpush1.xpose.msra.mxu0 0.0
      %771 = vmatprep.subr.mxu0 0.0
      %772 = vmatpush1.xpose.msra.mxu0 0.0
      %773 = vmatprep.subr.mxu0 0.0
      %774 = vmatpush1.xpose.msra.mxu0 0.0
      %775 = vmatprep.subr.mxu0 0.0
      %776 = vmatpush1.xpose.msra.mxu0 0.0
      %777 = vmatprep.subr.mxu0 0.0
      %778 = vmatpush1.xpose.msra.mxu0 0.0
      %779 = vmatprep.subr.mxu0 0.0
      %780 = vmatpush1.xpose.msra.mxu0 0.0
      %781 = vmatprep.subr.mxu0 0.0
      %782 = vmatpush1.xpose.msra.mxu0 0.0
      %783 = vmatprep.subr.mxu0 0.0
      %784 = vmatpush1.xpose.msra.mxu0 0.0
      %785 = vmatprep.subr.mxu0 0.0
      %786 = vmatpush1.xpose.msra.mxu0 0.0
      %787 = vmatprep.subr.mxu0 0.0
      %788 = vmatpush1.xpose.msra.mxu0 0.0
      %789 = vmatprep.subr.mxu0 0.0
      %790 = vmatpush1.xpose.msra.mxu0 0.0
      %791 = vmatprep.subr.mxu0 0.0
      %792 = vmatpush1.xpose.msra.mxu0 0.0
      %793 = vmatprep.subr.mxu0 0.0
      %794 = vmatpush1.xpose.msra.mxu0 0.0
      %795 = vmatprep.subr.mxu0 0.0
      %796 = vmatpush1.xpose.msra.mxu0 0.0
      %797 = vmatprep.subr.mxu0 0.0
      %798 = vmatpush1.xpose.msra.mxu0 0.0
      %799 = vmatprep.subr.mxu0 0.0
      %800 = vmatpush1.xpose.msra.mxu0 0.0
      %801 = vmatprep.subr.mxu0 0.0
      %802 = vmatpush1.xpose.msra.mxu0 0.0
      %803 = vmatprep.subr.mxu0 0.0
      %804 = vmatpush1.xpose.msra.mxu0 0.0
      %805 = vmatprep.subr.mxu0 0.0
      %806 = vmatpush1.xpose.msra.mxu0 0.0
      %807 = vmatprep.subr.mxu0 0.0
      %808 = vmatpush1.xpose.msra.mxu0 0.0
      %809 = vmatprep.subr.mxu0 0.0
      %810 = vmatpush1.xpose.msra.mxu0 0.0
      %811 = vmatprep.subr.mxu0 0.0
      %812 = vmatpush1.xpose.msra.mxu0 0.0
      %813 = vmatprep.mubr.f32.mxu0 %v746
      %814 = vmatmul.mubr.f32.gmra.mrb[0].mxu0 %v745
      %v815 = vpop.f32.mrb[0].mxu0
      %v816 = vadd.f32 0.0, %v815
      %v817 = vpop.f32.mrb[0].mxu0
      %818 = vdwg.mxu0
      %v821 = vunpack.c.l.s4 1983009808
      %v822 = vunpack.c.0.s8 %v821
      %v823 = vlaneseq
      %v824 = vshrl.u32 %v823, 7
      %v825 = vsub.s32 %v822, %v824
      %v826 = vrot.slane %v737, %v825
      %v827 = vcombine.high %v826, %v826
      %830 = vmatprep.subr.mxu0 %v827
      %831 = vmatpush1.xpose.msra.mxu0 %v826
      %832 = vmatprep.subr.mxu0 0.0
      %833 = vmatpush1.xpose.msra.mxu0 0.0
      %834 = vmatprep.subr.mxu0 0.0
      %835 = vmatpush1.xpose.msra.mxu0 0.0
      %836 = vmatprep.subr.mxu0 0.0
      %837 = vmatpush1.xpose.msra.mxu0 0.0
      %838 = vmatprep.subr.mxu0 0.0
      %839 = vmatpush1.xpose.msra.mxu0 0.0
      %840 = vmatprep.subr.mxu0 0.0
      %841 = vmatpush1.xpose.msra.mxu0 0.0
      %842 = vmatprep.subr.mxu0 0.0
      %843 = vmatpush1.xpose.msra.mxu0 0.0
      %844 = vmatprep.subr.mxu0 0.0
      %845 = vmatpush1.xpose.msra.mxu0 0.0
      %846 = vmatprep.subr.mxu0 0.0
      %847 = vmatpush1.xpose.msra.mxu0 0.0
      %848 = vmatprep.subr.mxu0 0.0
      %849 = vmatpush1.xpose.msra.mxu0 0.0
      %850 = vmatprep.subr.mxu0 0.0
      %851 = vmatpush1.xpose.msra.mxu0 0.0
      %852 = vmatprep.subr.mxu0 0.0
      %853 = vmatpush1.xpose.msra.mxu0 0.0
      %854 = vmatprep.subr.mxu0 0.0
      %855 = vmatpush1.xpose.msra.mxu0 0.0
      %856 = vmatprep.subr.mxu0 0.0
      %857 = vmatpush1.xpose.msra.mxu0 0.0
      %858 = vmatprep.subr.mxu0 0.0
      %859 = vmatpush1.xpose.msra.mxu0 0.0
      %860 = vmatprep.subr.mxu0 0.0
      %861 = vmatpush1.xpose.msra.mxu0 0.0
      %862 = vmatprep.subr.mxu0 0.0
      %863 = vmatpush1.xpose.msra.mxu0 0.0
      %864 = vmatprep.subr.mxu0 0.0
      %865 = vmatpush1.xpose.msra.mxu0 0.0
      %866 = vmatprep.subr.mxu0 0.0
      %867 = vmatpush1.xpose.msra.mxu0 0.0
      %868 = vmatprep.subr.mxu0 0.0
      %869 = vmatpush1.xpose.msra.mxu0 0.0
      %870 = vmatprep.subr.mxu0 0.0
      %871 = vmatpush1.xpose.msra.mxu0 0.0
      %872 = vmatprep.subr.mxu0 0.0
      %873 = vmatpush1.xpose.msra.mxu0 0.0
      %874 = vmatprep.subr.mxu0 0.0
      %875 = vmatpush1.xpose.msra.mxu0 0.0
      %876 = vmatprep.subr.mxu0 0.0
      %877 = vmatpush1.xpose.msra.mxu0 0.0
      %878 = vmatprep.subr.mxu0 0.0
      %879 = vmatpush1.xpose.msra.mxu0 0.0
      %880 = vmatprep.subr.mxu0 0.0
      %881 = vmatpush1.xpose.msra.mxu0 0.0
      %882 = vmatprep.subr.mxu0 0.0
      %883 = vmatpush1.xpose.msra.mxu0 0.0
      %884 = vmatprep.subr.mxu0 0.0
      %885 = vmatpush1.xpose.msra.mxu0 0.0
      %886 = vmatprep.subr.mxu0 0.0
      %887 = vmatpush1.xpose.msra.mxu0 0.0
      %888 = vmatprep.subr.mxu0 0.0
      %889 = vmatpush1.xpose.msra.mxu0 0.0
      %890 = vmatprep.subr.mxu0 0.0
      %891 = vmatpush1.xpose.msra.mxu0 0.0
      %892 = vmatprep.subr.mxu0 0.0
      %893 = vmatpush1.xpose.msra.mxu0 0.0
      %894 = vmatprep.mubr.f32.mxu0 %v827
      %895 = vmatmul.mubr.f32.gmra.mrb[0].mxu0 %v826
      %v896 = vpop.f32.mrb[0].mxu0
      %v897 = vadd.f32 0.0, %v896
      %v898 = vpop.f32.mrb[0].mxu0
      %899 = vdwg.mxu0
      %900 = vmatprep.subr.mxu0 %v827
      %901 = vmatpush1.xpose.msra.mxu0 %v826
      %902 = vmatprep.subr.mxu0 0.0
      %903 = vmatpush1.xpose.msra.mxu0 0.0
      %904 = vmatprep.subr.mxu0 0.0
      %905 = vmatpush1.xpose.msra.mxu0 0.0
      %906 = vmatprep.subr.mxu0 0.0
      %907 = vmatpush1.xpose.msra.mxu0 0.0
      %908 = vmatprep.subr.mxu0 0.0
      %909 = vmatpush1.xpose.msra.mxu0 0.0
      %910 = vmatprep.subr.mxu0 0.0
      %911 = vmatpush1.xpose.msra.mxu0 0.0
      %912 = vmatprep.subr.mxu0 0.0
      %913 = vmatpush1.xpose.msra.mxu0 0.0
      %914 = vmatprep.subr.mxu0 0.0
      %915 = vmatpush1.xpose.msra.mxu0 0.0
      %916 = vmatprep.subr.mxu0 0.0
      %917 = vmatpush1.xpose.msra.mxu0 0.0
      %918 = vmatprep.subr.mxu0 0.0
      %919 = vmatpush1.xpose.msra.mxu0 0.0
      %920 = vmatprep.subr.mxu0 0.0
      %921 = vmatpush1.xpose.msra.mxu0 0.0
      %922 = vmatprep.subr.mxu0 0.0
      %923 = vmatpush1.xpose.msra.mxu0 0.0
      %924 = vmatprep.subr.mxu0 0.0
      %925 = vmatpush1.xpose.msra.mxu0 0.0
      %926 = vmatprep.subr.mxu0 0.0
      %927 = vmatpush1.xpose.msra.mxu0 0.0
      %928 = vmatprep.subr.mxu0 0.0
      %929 = vmatpush1.xpose.msra.mxu0 0.0
      %930 = vmatprep.subr.mxu0 0.0
      %931 = vmatpush1.xpose.msra.mxu0 0.0
      %932 = vmatprep.subr.mxu0 0.0
      %933 = vmatpush1.xpose.msra.mxu0 0.0
      %934 = vmatprep.subr.mxu0 0.0
      %935 = vmatpush1.xpose.msra.mxu0 0.0
      %936 = vmatprep.subr.mxu0 0.0
      %937 = vmatpush1.xpose.msra.mxu0 0.0
      %938 = vmatprep.subr.mxu0 0.0
      %939 = vmatpush1.xpose.msra.mxu0 0.0
      %940 = vmatprep.subr.mxu0 0.0
      %941 = vmatpush1.xpose.msra.mxu0 0.0
      %942 = vmatprep.subr.mxu0 0.0
      %943 = vmatpush1.xpose.msra.mxu0 0.0
      %944 = vmatprep.subr.mxu0 0.0
      %945 = vmatpush1.xpose.msra.mxu0 0.0
      %946 = vmatprep.subr.mxu0 0.0
      %947 = vmatpush1.xpose.msra.mxu0 0.0
      %948 = vmatprep.subr.mxu0 0.0
      %949 = vmatpush1.xpose.msra.mxu0 0.0
      %950 = vmatprep.subr.mxu0 0.0
      %951 = vmatpush1.xpose.msra.mxu0 0.0
      %952 = vmatprep.subr.mxu0 0.0
      %953 = vmatpush1.xpose.msra.mxu0 0.0
      %954 = vmatprep.subr.mxu0 0.0
      %955 = vmatpush1.xpose.msra.mxu0 0.0
      %956 = vmatprep.subr.mxu0 0.0
      %957 = vmatpush1.xpose.msra.mxu0 0.0
      %958 = vmatprep.subr.mxu0 0.0
      %959 = vmatpush1.xpose.msra.mxu0 0.0
      %960 = vmatprep.subr.mxu0 0.0
      %961 = vmatpush1.xpose.msra.mxu0 0.0
      %962 = vmatprep.subr.mxu0 0.0
      %963 = vmatpush1.xpose.msra.mxu0 0.0
      %964 = vmatprep.mubr.f32.mxu0 %v746
      %965 = vmatmul.mubr.f32.gmra.mrb[0].mxu0 %v745
      %v966 = vpop.f32.mrb[0].mxu0
      %v967 = vadd.f32 0.0, %v966
      %v968 = vpop.f32.mrb[0].mxu0
      %969 = vdwg.mxu0
      %970 = vmatprep.subr.mxu0 %v746
      %971 = vmatpush1.xpose.msra.mxu0 %v745
      %972 = vmatprep.subr.mxu0 0.0
      %973 = vmatpush1.xpose.msra.mxu0 0.0
      %974 = vmatprep.subr.mxu0 0.0
      %975 = vmatpush1.xpose.msra.mxu0 0.0
      %976 = vmatprep.subr.mxu0 0.0
      %977 = vmatpush1.xpose.msra.mxu0 0.0
      %978 = vmatprep.subr.mxu0 0.0
      %979 = vmatpush1.xpose.msra.mxu0 0.0
      %980 = vmatprep.subr.mxu0 0.0
      %981 = vmatpush1.xpose.msra.mxu0 0.0
      %982 = vmatprep.subr.mxu0 0.0
      %983 = vmatpush1.xpose.msra.mxu0 0.0
      %984 = vmatprep.subr.mxu0 0.0
      %985 = vmatpush1.xpose.msra.mxu0 0.0
      %986 = vmatprep.subr.mxu0 0.0
      %987 = vmatpush1.xpose.msra.mxu0 0.0
      %988 = vmatprep.subr.mxu0 0.0
      %989 = vmatpush1.xpose.msra.mxu0 0.0
      %990 = vmatprep.subr.mxu0 0.0
      %991 = vmatpush1.xpose.msra.mxu0 0.0
      %992 = vmatprep.subr.mxu0 0.0
      %993 = vmatpush1.xpose.msra.mxu0 0.0
      %994 = vmatprep.subr.mxu0 0.0
      %995 = vmatpush1.xpose.msra.mxu0 0.0
      %996 = vmatprep.subr.mxu0 0.0
      %997 = vmatpush1.xpose.msra.mxu0 0.0
      %998 = vmatprep.subr.mxu0 0.0
      %999 = vmatpush1.xpose.msra.mxu0 0.0
      %1000 = vmatprep.subr.mxu0 0.0
      %1001 = vmatpush1.xpose.msra.mxu0 0.0
      %1002 = vmatprep.subr.mxu0 0.0
      %1003 = vmatpush1.xpose.msra.mxu0 0.0
      %1004 = vmatprep.subr.mxu0 0.0
      %1005 = vmatpush1.xpose.msra.mxu0 0.0
      %1006 = vmatprep.subr.mxu0 0.0
      %1007 = vmatpush1.xpose.msra.mxu0 0.0
      %1008 = vmatprep.subr.mxu0 0.0
      %1009 = vmatpush1.xpose.msra.mxu0 0.0
      %1010 = vmatprep.subr.mxu0 0.0
      %1011 = vmatpush1.xpose.msra.mxu0 0.0
      %1012 = vmatprep.subr.mxu0 0.0
      %1013 = vmatpush1.xpose.msra.mxu0 0.0
      %1014 = vmatprep.subr.mxu0 0.0
      %1015 = vmatpush1.xpose.msra.mxu0 0.0
      %1016 = vmatprep.subr.mxu0 0.0
      %1017 = vmatpush1.xpose.msra.mxu0 0.0
      %1018 = vmatprep.subr.mxu0 0.0
      %1019 = vmatpush1.xpose.msra.mxu0 0.0
      %1020 = vmatprep.subr.mxu0 0.0
      %1021 = vmatpush1.xpose.msra.mxu0 0.0
      %1022 = vmatprep.subr.mxu0 0.0
      %1023 = vmatpush1.xpose.msra.mxu0 0.0
      %1024 = vmatprep.subr.mxu0 0.0
      %1025 = vmatpush1.xpose.msra.mxu0 0.0
      %1026 = vmatprep.subr.mxu0 0.0
      %1027 = vmatpush1.xpose.msra.mxu0 0.0
      %1028 = vmatprep.subr.mxu0 0.0
      %1029 = vmatpush1.xpose.msra.mxu0 0.0
      %1030 = vmatprep.subr.mxu0 0.0
      %1031 = vmatpush1.xpose.msra.mxu0 0.0
      %1032 = vmatprep.subr.mxu0 0.0
      %1033 = vmatpush1.xpose.msra.mxu0 0.0
      %1034 = vmatprep.mubr.f32.mxu0 %v827
      %1035 = vmatmul.mubr.f32.gmra.mrb[0].mxu0 %v826
      %v1036 = vpop.f32.mrb[0].mxu0
      %v1037 = vadd.f32 0.0, %v1036
      %v1038 = vpop.f32.mrb[0].mxu0
      %1039 = vdwg.mxu0
      %v1040 = vsub.f32 %v816, 1.0
      %v1041 = vmul.f32 %v1040, 2.0
      %v1042 = vmul.f32 %v1041, 1.442695
      %v1043 = vpow.pop %v1042
      %v1044 = vsub.f32 %v897, 1.0
      %v1045 = vmul.f32 %v1044, 2.0
      %v1046 = vmul.f32 %v1045, 1.442695
      %v1047 = vpow.pop %v1046
      %v1048 = vsub.f32 %v967, 1.0
      %v1049 = vmul.f32 %v1048, 2.0
      %v1050 = vmul.f32 %v1049, 1.442695
      %v1051 = vpow.pop %v1050
      %v1052 = vsub.f32 %v1037, 1.0
      %v1053 = vmul.f32 %v1052, 2.0
      %v1054 = vmul.f32 %v1053, 1.442695
      %v1055 = vpow.pop %v1054
      %v1056 = vmul.f32 %v701, %v737
      %v1059 = vunpack.c.l.s4 1983009808
      %v1060 = vunpack.c.0.s8 %v1059
      %v1061 = vlaneseq
      %v1062 = vshrl.u32 %v1061, 7
      %v1063 = vsub.s32 %v1060, %v1062
      %v1064 = vrot.slane %v1056, %v1063
      %v1065 = vcombine.high %v1064, %v1064
      %v1068 = vsel %vm677, %v1064, 0.0
      %v1069 = vsel %vm677, %v1065, 0.0
      %v1070 = vadd.f32 %v1068, %v1069
      %1071 = vadd.xlane.f32.xlu0 %v1070
      %v1072 = vpop.xlane.xlu0 %1071
      %v1073 = vsub.f32 %v1072, 1.0
      %v1074 = vmul.f32 %v1073, 2.0
      %v1075 = vsel %vm639, %v1043, 0.0
      %1076 = vadd.xlane.f32.xlu0 %v1075
      %v1077 = vpop.xlane.xlu0 %1076
      %v1078 = vsel %vm639, %v1051, 0.0
      %1079 = vadd.xlane.f32.xlu0 %v1078
      %v1080 = vpop.xlane.xlu0 %1079
      %v1081 = vadd.f32 %v1077, %v1080
      %v1082 = vsub.f32 %v1081, 1.0
      %v1083 = vsel %vm639, %v1047, 0.0
      %1084 = vadd.xlane.f32.xlu0 %v1083
      %v1085 = vpop.xlane.xlu0 %1084
      %v1086 = vsel %vm639, %v1055, 0.0
      %1087 = vadd.xlane.f32.xlu0 %v1086
      %v1088 = vpop.xlane.xlu0 %1087
      %v1089 = vadd.f32 %v1085, %v1088
      %v1090 = vsub.f32 %v1089, 1.0
      %v1091 = vlog2.pop %v1082
      %v1092 = vmul.f32 %v1091, 0.6931472
      %v1093 = vlog2.pop %v1090
      %v1094 = vmul.f32 %v1093, 0.6931472
      %v1095 = vadd.f32 %v1092, %v1094
      %v1096 = vmul.f32 %v1074, 2.0
      %v1097 = vsub.f32 %v1095, %v1096
      %v1098 = vadd.f32 %v662, %v1097
      %v1099 = vmul.f32 %v1098, 0.5
      %vm1100 = vcmask 1024
      %1101 = vst.msk [vmem:[%s4] sm:$0x3] %vm1100, %v1099
    $region33: #{tpu_custom_call.1} parent=1 // pred_fallthru
      _
    // Predicated region
    $region34: #{tpu_custom_call.1} parent=1 // pred_check
      _
    $region35: #{tpu_custom_call.1} parent=1 // pred_check_branch
      %1103 = sbr.rel (0) target = $region37
    $region36: #{tpu_custom_call.1} parent=1 // pred_region
      _
    $region37: #{tpu_custom_call.1} parent=1 // pred_fallthru
      _
    // Predicated region
    $region38: #{tpu_custom_call.1} parent=1 // pred_check
      _
    $region39: #{tpu_custom_call.1} parent=1 // pred_check_branch
      %1105 = sbr.rel (0) target = $region41
    $region40: #{tpu_custom_call.1} parent=1 // pred_region
      _
    $region41: #{tpu_custom_call.1} parent=1 // pred_fallthru
      _
    %1106 = vsyncpa [#allocation8], 1
    %1107 = vsyncpa [#allocation10], 1

</llo_original>
